<compile_context>
chip_gen: v6e
topology: v6e:2x2x1
jax: 0.10.0
libtpu: 0.0.40
codegen_flags: <defaults>
</compile_context>

<pallas_src>
import functools
import math

import jax
import jax.numpy as jnp
from jax import lax
from jax.experimental import pallas as pl
from jax.experimental.pallas import tpu as pltpu

LN_EPS = 1e-5  # nn.LayerNorm default eps


def _layernorm(x, w, b):
    mu = jnp.mean(x, axis=-1, keepdims=True)
    var = jnp.mean((x - mu) ** 2, axis=-1, keepdims=True)
    return (x - mu) * lax.rsqrt(var + LN_EPS) * w + b


def _tblock_kernel(num_heads,
                   seq_ref, mask_ref,
                   ln1_w, ln1_b,
                   wq_t, bq, wkv_t, bkv,
                   ln2_w, ln2_b,
                   w1_t, b1, w2_t, b2,
                   out_ref, attn_ref):
    seq = seq_ref[...]                       # (TB, L, D) f32
    TB, L, D = seq.shape
    H = num_heads
    Dh = D // H
    scale = 1.0 / math.sqrt(Dh)

    # ---- flatten all rows of the batch block: fills MXU rows ----
    x2 = seq.reshape(TB * L, D)
    qin2 = _layernorm(x2, ln1_w[...], ln1_b[...])            # queries = LN1(seq), f32

    # Q from LN1(seq); K and V fused into one matmul from raw seq.
    # bf16 operands on the MXU, f32 accumulation; scale folded into Q.
    q2 = (jnp.dot(qin2.astype(jnp.bfloat16), wq_t[...],
                  preferred_element_type=jnp.float32) + bq[...]) * scale
    kv2 = jnp.dot(x2.astype(jnp.bfloat16), wkv_t[...],
                  preferred_element_type=jnp.float32) + bkv[...]
    k2 = kv2[:, :D]
    v2 = kv2[:, D:]

    qin3 = qin2.reshape(TB, L, D)

    # key / query padding masks: sign(sum(|.|, -1)) as in the PyTorch module
    # (key mask from raw seq; query mask from LN1(seq) == the module's queries)
    key_keep = (jnp.sum(jnp.abs(seq), axis=-1) > 0.0)[:, None, :]       # (TB,1,Lk)
    q_keep = (jnp.sum(jnp.abs(qin3), axis=-1, keepdims=True) > 0.0)     # (TB,Lq,1)
    q_keep = q_keep.astype(jnp.float32)

    # causal (lower-triangular) mask, built once per invocation
    rows = lax.broadcasted_iota(jnp.int32, (L, L), 0)
    cols = lax.broadcasted_iota(jnp.int32, (L, L), 1)
    allowed = jnp.logical_and((cols <= rows)[None, :, :], key_keep)     # (TB,Lq,Lk)

    probs_list = []
    ctx_list = []
    for h in range(H):                       # static unroll over heads (small H)
        sl = slice(h * Dh, (h + 1) * Dh)
        qh = q2[:, sl].reshape(TB, L, Dh).astype(jnp.bfloat16)
        kh = k2[:, sl].reshape(TB, L, Dh).astype(jnp.bfloat16)
        vh = v2[:, sl].reshape(TB, L, Dh).astype(jnp.bfloat16)

        s = jnp.einsum('bqd,bkd->bqk', qh, kh,
                       preferred_element_type=jnp.float32)              # (TB,L,L) f32
        s = jnp.where(allowed, s, -1e30)
        m = jnp.max(s, axis=-1, keepdims=True)
        p = jnp.where(allowed, jnp.exp(s - m), 0.0)
        denom = jnp.sum(p, axis=-1, keepdims=True)
        # softmax -> nan_to_num(0) for fully-masked rows -> query mask,
        # reciprocal on the EUP slot instead of a VALU divide
        inv = jnp.where(denom > 0.0, pl.reciprocal(denom, approx=True), 0.0)
        probs = p * inv * q_keep                                         # (TB,L,L)

        probs_list.append(probs)
        ctx_list.append(jnp.einsum('bqk,bkd->bqd',
                                   probs.astype(jnp.bfloat16), vh,
                                   preferred_element_type=jnp.float32))  # (TB,L,Dh)

    # one full-slab store of the attention weights (PyTorch (B, H, Lq, Lk) layout)
    attn_ref[...] = jnp.stack(probs_list, axis=1)

    # concat heads in registers (no VMEM scratch round-trip)
    attn_out = jnp.concatenate(ctx_list, axis=-1)             # (TB, L, D)

    x3 = attn_out + qin3                                       # x + queries
    x2b = _layernorm(x3.reshape(TB * L, D), ln2_w[...], ln2_b[...])
    resid = x2b

    # point-wise feed-forward: dense1 -> ReLU -> dense2 (dropout = identity)
    hdn = jnp.maximum(
        jnp.dot(x2b.astype(jnp.bfloat16), w1_t[...],
                preferred_element_type=jnp.float32) + b1[...],
        0.0)
    y = jnp.dot(hdn.astype(jnp.bfloat16), w2_t[...],
                preferred_element_type=jnp.float32) + b2[...]
    out = (y + resid).reshape(TB, L, D) * mask_ref[...]        # (TB,L,1) bcast over D
    out_ref[...] = out


def _est_vmem_bytes(block_b, L, D, H, hidden):
    rows = block_b * L
    # double-buffered pipelined blocks: seq, mask, out, attention slab (f32)
    io = 2 * (rows * D * 4 + block_b * L * 4 + rows * D * 4
              + block_b * H * L * L * 4)
    # rough live activations inside the body (f32 + bf16 copies)
    act = rows * (6 * D + hidden) * 4 + block_b * H * L * L * 4
    # resident weights (bf16 matmul weights + f32 biases / LN params)
    wts = (D * D + D * 2 * D + D * hidden + hidden * D) * 2 + (8 * D + hidden) * 4
    return io + act + wts


def _default_block_b(B, L, D, H, hidden, vmem_budget_bytes=40 * 1024 * 1024):
    """Prefer grid >= 2 (DMA/compute pipelining + both v7x TensorCores); among
    blocks that fit the VMEM budget pick the smallest with block_b*L >= 256
    MXU rows, otherwise the largest that fits."""
    divisors = [d for d in range(1, B + 1) if B % d == 0]
    cands = [d for d in divisors if (B // d) >= 2] or divisors
    fit = [d for d in cands
           if _est_vmem_bytes(d, L, D, H, hidden) <= vmem_budget_bytes] or [min(cands)]
    big_enough = [d for d in fit if d * L >= 256]
    return min(big_enough) if big_enough else max(fit)


def transformer_block_forward(seq, mask, params, num_heads, block_b=None):
    """seq: (B, L, D) f32.  mask: (B, L, 1) f32 or None.  params are f32; the
    matmul weight matrices are cast to bf16 before entering the kernel."""
    B, L, D = seq.shape
    H = num_heads
    (ln1_w, ln1_b, wq_t, bq, wkv_t, bkv,
     ln2_w, ln2_b, w1_t, b1, w2_t, b2) = params
    hidden = w1_t.shape[1]

    if mask is None:
        mask = jnp.ones((B, L, 1), jnp.float32)
    mask = mask.reshape(B, L, 1).astype(jnp.float32)

    kparams = [ln1_w, ln1_b,
               wq_t.astype(jnp.bfloat16), bq,
               wkv_t.astype(jnp.bfloat16), bkv,
               ln2_w, ln2_b,
               w1_t.astype(jnp.bfloat16), b1,
               w2_t.astype(jnp.bfloat16), b2]

    if block_b is None:
        block_b = _default_block_b(B, L, D, H, hidden)
    assert B % block_b == 0
    grid = (B // block_b,)

    def rep_spec(arr):
        nd = arr.ndim
        return pl.BlockSpec(arr.shape, lambda i, _nd=nd: (0,) * _nd)

    in_specs = (
        [pl.BlockSpec((block_b, L, D), lambda i: (i, 0, 0)),
         pl.BlockSpec((block_b, L, 1), lambda i: (i, 0, 0))]
        + [rep_spec(p) for p in kparams]
    )
    out_specs = (
        pl.BlockSpec((block_b, L, D), lambda i: (i, 0, 0)),
        pl.BlockSpec((block_b, H, L, L), lambda i: (i, 0, 0, 0)),
    )

    vmem_limit = int(min(64 * 1024 * 1024,
                         max(32 * 1024 * 1024,
                             2 * _est_vmem_bytes(block_b, L, D, H, hidden))))

    kernel = functools.partial(_tblock_kernel, H)
    out, attn = pl.pallas_call(
        kernel,
        out_shape=(jax.ShapeDtypeStruct((B, L, D), jnp.float32),
                   jax.ShapeDtypeStruct((B, H, L, L), jnp.float32)),
        grid=grid,
        in_specs=in_specs,
        out_specs=out_specs,
        compiler_params=pltpu.CompilerParams(
            dimension_semantics=("parallel",),
            vmem_limit_bytes=vmem_limit),
    )(seq, mask, *kparams)
    return out, attn


def _reference_forward(seq, mask, params, num_heads):
    """Pure-JAX f32 reference mirroring the PyTorch module (eval mode)."""
    (ln1_w, ln1_b, wq_t, bq, wkv_t, bkv,
     ln2_w, ln2_b, w1_t, b1, w2_t, b2) = params
    B, L, D = seq.shape
    H = num_heads
    Dh = D // H

    def ln(x, w, b):
        mu = jnp.mean(x, -1, keepdims=True)
        var = jnp.mean((x - mu) ** 2, -1, keepdims=True)
        return (x - mu) / jnp.sqrt(var + LN_EPS) * w + b

    queries = ln(seq, ln1_w, ln1_b)
    keys = seq
    Q = queries @ wq_t + bq
    K = keys @ wkv_t[:, :D] + bkv[:, :D]
    V = keys @ wkv_t[:, D:] + bkv[:, D:]
    Qh = Q.reshape(B, L, H, Dh).transpose(0, 2, 1, 3)
    Kh = K.reshape(B, L, H, Dh).transpose(0, 2, 1, 3)
    Vh = V.reshape(B, L, H, Dh).transpose(0, 2, 1, 3)
    s = jnp.einsum('bhqd,bhkd->bhqk', Qh, Kh) / math.sqrt(Dh)
    key_keep = (jnp.sum(jnp.abs(keys), -1) > 0)[:, None, None, :]
    causal = (jnp.tril(jnp.ones((L, L))) > 0)[None, None]
    allowed = jnp.logical_and(causal, key_keep)
    s = jnp.where(allowed, s, -jnp.inf)
    m = jnp.max(s, -1, keepdims=True)
    e = jnp.exp(s - m)
    p = e / jnp.sum(e, -1, keepdims=True)
    p = jnp.nan_to_num(p, nan=0.0, posinf=0.0, neginf=0.0)
    q_keep = (jnp.sum(jnp.abs(queries), -1) > 0).astype(jnp.float32)[:, None, :, None]
    p = p * q_keep
    attn = p
    o = jnp.einsum('bhqk,bhkd->bhqd', p, Vh).transpose(0, 2, 1, 3).reshape(B, L, D)
    x = o + queries
    x = ln(x, ln2_w, ln2_b)
    resid = x
    hdn = jnp.maximum(x @ w1_t + b1, 0.0)
    y = hdn @ w2_t + b2
    out = (y + resid) * mask
    return out, attn


if __name__ == "__main__":
    B, L, D = 2, 8, 32
    H = 4                    # num_heads
    HIDDEN = 64              # hidden_dim of the FFN
    STD = 0.1

    key = jax.random.PRNGKey(0)
    (k_seq, k_ln1w, k_ln1b, k_q, k_k, k_v,
     k_ln2w, k_ln2b, k_w1, k_w2) = jax.random.split(key, 10)

    seq = STD * jax.random.normal(k_seq, (B, L, D), jnp.float32)
    # zero a couple of positions so the key-padding-mask / nan_to_num path runs
    seq = seq.at[0, :2, :].set(0.0)

    # output mask (timeline-style), kept slim: (B, L, 1); broadcast in-kernel
    mask = (jnp.sum(jnp.abs(seq), axis=-1, keepdims=True) > 0).astype(jnp.float32)

    # parameters (pre-transposed so every in-kernel matmul is (rows,in)@(in,out))
    ln1_w = (1.0 + STD * jax.random.normal(k_ln1w, (1, D))).astype(jnp.float32)
    ln1_b = (STD * jax.random.normal(k_ln1b, (1, D))).astype(jnp.float32)
    wq_t = STD * jax.random.normal(k_q, (D, D), jnp.float32)
    bq = jnp.zeros((1, D), jnp.float32)
    wk_t = STD * jax.random.normal(k_k, (D, D), jnp.float32)
    wv_t = STD * jax.random.normal(k_v, (D, D), jnp.float32)
    wkv_t = jnp.concatenate([wk_t, wv_t], axis=1)            # fused K/V projection
    bkv = jnp.zeros((1, 2 * D), jnp.float32)
    ln2_w = (1.0 + STD * jax.random.normal(k_ln2w, (1, D))).astype(jnp.float32)
    ln2_b = (STD * jax.random.normal(k_ln2b, (1, D))).astype(jnp.float32)
    w1_t = STD * jax.random.normal(k_w1, (D, HIDDEN), jnp.float32)
    b1 = jnp.zeros((1, HIDDEN), jnp.float32)
    w2_t = STD * jax.random.normal(k_w2, (HIDDEN, D), jnp.float32)
    b2 = jnp.zeros((1, D), jnp.float32)

    params = [ln1_w, ln1_b, wq_t, bq, wkv_t, bkv,
              ln2_w, ln2_b, w1_t, b1, w2_t, b2]

    out, attn = transformer_block_forward(seq, mask, params, num_heads=H)
    out = jax.block_until_ready(out)
    attn = jax.block_until_ready(attn)

    assert out.shape == (B, L, D)
    assert attn.shape == (B, H, L, L)
    assert bool(jnp.all(jnp.isfinite(out)))
    assert bool(jnp.all(jnp.isfinite(attn)))

    # each attention row is a probability distribution or all-zero (masked row)
    row_sums = jnp.sum(attn, axis=-1)
    assert bool(jnp.all((row_sums > -1e-3) & (row_sums < 1.02)))

    # compare against a pure-JAX f32 reference (kernel uses bf16 MXU operands +
    # an approximate reciprocal in the softmax -> loose tolerances)
    out_expected, attn_expected = _reference_forward(seq, mask, params, H)
    assert bool(jnp.max(jnp.abs(out - out_expected)) < 5e-2)
    assert bool(jnp.max(jnp.abs(attn - attn_expected)) < 2e-2)

    print("KERNEL_OK")
</pallas_src>

<mosaic_0001>
module attributes {stable_mosaic.version = 11 : i64} {
  func.func @_tblock_kernel(%arg0: i32, %arg1: memref<1x8x32xf32, #tpu.memory_space<vmem>>, %arg2: memref<1x8x1xf32, #tpu.memory_space<vmem>>, %arg3: memref<1x32xf32, #tpu.memory_space<vmem>>, %arg4: memref<1x32xf32, #tpu.memory_space<vmem>>, %arg5: memref<32x32xbf16, #tpu.memory_space<vmem>>, %arg6: memref<1x32xf32, #tpu.memory_space<vmem>>, %arg7: memref<32x64xbf16, #tpu.memory_space<vmem>>, %arg8: memref<1x64xf32, #tpu.memory_space<vmem>>, %arg9: memref<1x32xf32, #tpu.memory_space<vmem>>, %arg10: memref<1x32xf32, #tpu.memory_space<vmem>>, %arg11: memref<32x64xbf16, #tpu.memory_space<vmem>>, %arg12: memref<1x64xf32, #tpu.memory_space<vmem>>, %arg13: memref<64x32xbf16, #tpu.memory_space<vmem>>, %arg14: memref<1x32xf32, #tpu.memory_space<vmem>>, %arg15: memref<1x8x32xf32, #tpu.memory_space<vmem>>, %arg16: memref<1x4x8x8xf32, #tpu.memory_space<vmem>>) attributes {dimension_semantics = [#tpu.dimension_semantics<parallel>], iteration_bounds = array<i64: 2>, scalar_prefetch = 0 : i64, scratch_operands = 0 : i64, tpu.core_type = #tpu.core_type<tc>, window_params = [{transform_indices = @transform_0, window_bounds = array<i64: 1, 8, 32>}, {transform_indices = @transform_1, window_bounds = array<i64: 1, 8, 1>}, {pipeline_mode = #tpu.pipeline_mode<synchronous>, transform_indices = @transform_2, window_bounds = array<i64: 1, 32>}, {pipeline_mode = #tpu.pipeline_mode<synchronous>, transform_indices = @transform_3, window_bounds = array<i64: 1, 32>}, {pipeline_mode = #tpu.pipeline_mode<synchronous>, transform_indices = @transform_4, window_bounds = array<i64: 32, 32>}, {pipeline_mode = #tpu.pipeline_mode<synchronous>, transform_indices = @transform_5, window_bounds = array<i64: 1, 32>}, {pipeline_mode = #tpu.pipeline_mode<synchronous>, transform_indices = @transform_6, window_bounds = array<i64: 32, 64>}, {pipeline_mode = #tpu.pipeline_mode<synchronous>, transform_indices = @transform_7, window_bounds = array<i64: 1, 64>}, {pipeline_mode = #tpu.pipeline_mode<synchronous>, transform_indices = @transform_8, window_bounds = array<i64: 1, 32>}, {pipeline_mode = #tpu.pipeline_mode<synchronous>, transform_indices = @transform_9, window_bounds = array<i64: 1, 32>}, {pipeline_mode = #tpu.pipeline_mode<synchronous>, transform_indices = @transform_10, window_bounds = array<i64: 32, 64>}, {pipeline_mode = #tpu.pipeline_mode<synchronous>, transform_indices = @transform_11, window_bounds = array<i64: 1, 64>}, {pipeline_mode = #tpu.pipeline_mode<synchronous>, transform_indices = @transform_12, window_bounds = array<i64: 64, 32>}, {pipeline_mode = #tpu.pipeline_mode<synchronous>, transform_indices = @transform_13, window_bounds = array<i64: 1, 32>}, {transform_indices = @transform_14, window_bounds = array<i64: 1, 8, 32>}, {transform_indices = @transform_15, window_bounds = array<i64: 1, 4, 8, 8>}]} {
    %c0 = arith.constant 0 : index
    %c0_0 = arith.constant 0 : index
    %c0_1 = arith.constant 0 : index
    %0 = vector.load %arg1[%c0, %c0_0, %c0_1] : memref<1x8x32xf32, #tpu.memory_space<vmem>>, vector<1x8x32xf32>
    %1 = vector.shape_cast %0 : vector<1x8x32xf32> to vector<8x32xf32>
    %c0_2 = arith.constant 0 : index
    %c0_3 = arith.constant 0 : index
    %2 = vector.load %arg3[%c0_2, %c0_3] : memref<1x32xf32, #tpu.memory_space<vmem>>, vector<1x32xf32>
    %c0_4 = arith.constant 0 : index
    %c0_5 = arith.constant 0 : index
    %3 = vector.load %arg4[%c0_4, %c0_5] : memref<1x32xf32, #tpu.memory_space<vmem>>, vector<1x32xf32>
    %cst = arith.constant dense<0.000000e+00> : vector<8xf32>
    %4 = vector.multi_reduction <add>, %1, %cst [1] : vector<8x32xf32> to vector<8xf32>
    %5 = vector.shape_cast %4 : vector<8xf32> to vector<8x1xf32>
    %cst_6 = arith.constant 3.200000e+01 : f32
    %6 = vector.broadcast %cst_6 : f32 to vector<8x1xf32>
    %7 = arith.divf %5, %6 : vector<8x1xf32>
    %8 = vector.broadcast %7 : vector<8x1xf32> to vector<8x32xf32>
    %9 = arith.subf %1, %8 : vector<8x32xf32>
    %10 = arith.mulf %9, %9 : vector<8x32xf32>
    %cst_7 = arith.constant dense<0.000000e+00> : vector<8xf32>
    %11 = vector.multi_reduction <add>, %10, %cst_7 [1] : vector<8x32xf32> to vector<8xf32>
    %12 = vector.shape_cast %11 : vector<8xf32> to vector<8x1xf32>
    %cst_8 = arith.constant 3.200000e+01 : f32
    %13 = vector.broadcast %cst_8 : f32 to vector<8x1xf32>
    %14 = arith.divf %12, %13 : vector<8x1xf32>
    %15 = vector.broadcast %7 : vector<8x1xf32> to vector<8x32xf32>
    %16 = arith.subf %1, %15 : vector<8x32xf32>
    %cst_9 = arith.constant 9.99999974E-6 : f32
    %17 = vector.broadcast %cst_9 : f32 to vector<8x1xf32>
    %18 = arith.addf %14, %17 : vector<8x1xf32>
    %19 = math.rsqrt %18 : vector<8x1xf32>
    %20 = vector.broadcast %19 : vector<8x1xf32> to vector<8x32xf32>
    %21 = arith.mulf %16, %20 : vector<8x32xf32>
    %22 = vector.broadcast %2 : vector<1x32xf32> to vector<8x32xf32>
    %23 = arith.mulf %21, %22 : vector<8x32xf32>
    %24 = vector.broadcast %3 : vector<1x32xf32> to vector<8x32xf32>
    %25 = arith.addf %23, %24 : vector<8x32xf32>
    %26 = arith.truncf %25 : vector<8x32xf32> to vector<8x32xbf16>
    %c0_10 = arith.constant 0 : index
    %c0_11 = arith.constant 0 : index
    %27 = vector.load %arg5[%c0_10, %c0_11] : memref<32x32xbf16, #tpu.memory_space<vmem>>, vector<32x32xbf16>
    %cst_12 = arith.constant dense<0.000000e+00> : vector<8x32xf32>
    %28 = tpu.matmul %26, %27, %cst_12 {dimension_numbers = #tpu.dot_dimension_numbers<[1], [0], [0], [1], [0, 0, 1, 1], [], []>} : vector<8x32xbf16>, vector<32x32xbf16>, vector<8x32xf32> -> vector<8x32xf32>
    %c0_13 = arith.constant 0 : index
    %c0_14 = arith.constant 0 : index
    %29 = vector.load %arg6[%c0_13, %c0_14] : memref<1x32xf32, #tpu.memory_space<vmem>>, vector<1x32xf32>
    %30 = vector.broadcast %29 : vector<1x32xf32> to vector<8x32xf32>
    %31 = arith.addf %28, %30 : vector<8x32xf32>
    %cst_15 = arith.constant 0.353553385 : f32
    %32 = vector.broadcast %cst_15 : f32 to vector<8x32xf32>
    %33 = arith.mulf %31, %32 : vector<8x32xf32>
    %34 = arith.truncf %1 : vector<8x32xf32> to vector<8x32xbf16>
    %c0_16 = arith.constant 0 : index
    %c0_17 = arith.constant 0 : index
    %35 = vector.load %arg7[%c0_16, %c0_17] : memref<32x64xbf16, #tpu.memory_space<vmem>>, vector<32x64xbf16>
    %cst_18 = arith.constant dense<0.000000e+00> : vector<8x64xf32>
    %36 = tpu.matmul %34, %35, %cst_18 {dimension_numbers = #tpu.dot_dimension_numbers<[1], [0], [0], [1], [0, 0, 1, 1], [], []>} : vector<8x32xbf16>, vector<32x64xbf16>, vector<8x64xf32> -> vector<8x64xf32>
    %c0_19 = arith.constant 0 : index
    %c0_20 = arith.constant 0 : index
    %37 = vector.load %arg8[%c0_19, %c0_20] : memref<1x64xf32, #tpu.memory_space<vmem>>, vector<1x64xf32>
    %38 = vector.broadcast %37 : vector<1x64xf32> to vector<8x64xf32>
    %39 = arith.addf %36, %38 : vector<8x64xf32>
    %40 = vector.extract_strided_slice %39 {offsets = [0, 0], sizes = [8, 32], strides = [1, 1]} : vector<8x64xf32> to vector<8x32xf32>
    %41 = vector.extract_strided_slice %39 {offsets = [0, 32], sizes = [8, 32], strides = [1, 1]} : vector<8x64xf32> to vector<8x32xf32>
    %42 = vector.shape_cast %25 : vector<8x32xf32> to vector<1x8x32xf32>
    %43 = math.absf %0 : vector<1x8x32xf32>
    %cst_21 = arith.constant dense<0.000000e+00> : vector<1x8xf32>
    %44 = vector.multi_reduction <add>, %43, %cst_21 [2] : vector<1x8x32xf32> to vector<1x8xf32>
    %cst_22 = arith.constant 0.000000e+00 : f32
    %45 = vector.broadcast %cst_22 : f32 to vector<1x8xf32>
    %46 = arith.cmpf ogt, %44, %45 : vector<1x8xf32>
    %47 = vector.shape_cast %46 : vector<1x8xi1> to vector<1x1x8xi1>
    %48 = math.absf %42 : vector<1x8x32xf32>
    %cst_23 = arith.constant dense<0.000000e+00> : vector<1x8xf32>
    %49 = vector.multi_reduction <add>, %48, %cst_23 [2] : vector<1x8x32xf32> to vector<1x8xf32>
    %50 = vector.shape_cast %49 : vector<1x8xf32> to vector<1x8x1xf32>
    %cst_24 = arith.constant 0.000000e+00 : f32
    %51 = vector.broadcast %cst_24 : f32 to vector<1x8x1xf32>
    %52 = arith.cmpf ogt, %50, %51 : vector<1x8x1xf32>
    %53 = arith.extui %52 : vector<1x8x1xi1> to vector<1x8x1xi32>
    %54 = arith.sitofp %53 : vector<1x8x1xi32> to vector<1x8x1xf32>
    %55 = tpu.iota {dimensions = array<i32: 0>} : vector<8x8xi32>
    %56 = tpu.iota {dimensions = array<i32: 1>} : vector<8x8xi32>
    %57 = arith.cmpi sle, %56, %55 : vector<8x8xi32>
    %58 = vector.shape_cast %57 : vector<8x8xi1> to vector<1x8x8xi1>
    %59 = vector.broadcast %47 : vector<1x1x8xi1> to vector<1x8x8xi1>
    %60 = arith.andi %58, %59 : vector<1x8x8xi1>
    %61 = vector.extract_strided_slice %33 {offsets = [0, 0], sizes = [8, 8], strides = [1, 1]} : vector<8x32xf32> to vector<8x8xf32>
    %62 = vector.shape_cast %61 : vector<8x8xf32> to vector<1x8x8xf32>
    %63 = arith.truncf %62 : vector<1x8x8xf32> to vector<1x8x8xbf16>
    %64 = vector.extract_strided_slice %40 {offsets = [0, 0], sizes = [8, 8], strides = [1, 1]} : vector<8x32xf32> to vector<8x8xf32>
    %65 = vector.shape_cast %64 : vector<8x8xf32> to vector<1x8x8xf32>
    %66 = arith.truncf %65 : vector<1x8x8xf32> to vector<1x8x8xbf16>
    %67 = vector.extract_strided_slice %41 {offsets = [0, 0], sizes = [8, 8], strides = [1, 1]} : vector<8x32xf32> to vector<8x8xf32>
    %68 = vector.shape_cast %67 : vector<8x8xf32> to vector<1x8x8xf32>
    %69 = arith.truncf %68 : vector<1x8x8xf32> to vector<1x8x8xbf16>
    "tpu.trace_start"() <{level = 10 : i32, message = "bqd,bkd->bqk"}> : () -> ()
    %cst_25 = arith.constant dense<0.000000e+00> : vector<1x8x8xf32>
    %70 = tpu.matmul %63, %66, %cst_25 {dimension_numbers = #tpu.dot_dimension_numbers<[2], [2], [1], [1], [0, 0, 0, 1, 1, 1], [0], [0]>} : vector<1x8x8xbf16>, vector<1x8x8xbf16>, vector<1x8x8xf32> -> vector<1x8x8xf32>
    %cst_26 = arith.constant -1.000000e+30 : f32
    "tpu.trace_stop"() : () -> ()
    %71 = vector.broadcast %cst_26 : f32 to vector<1x8x8xf32>
    %72 = arith.select %60, %70, %71 : vector<1x8x8xi1>, vector<1x8x8xf32>
    %cst_27 = arith.constant dense<0xFF800000> : vector<1x8xf32>
    %73 = vector.multi_reduction <maximumf>, %72, %cst_27 [2] : vector<1x8x8xf32> to vector<1x8xf32>
    %74 = vector.shape_cast %73 : vector<1x8xf32> to vector<1x8x1xf32>
    %75 = vector.broadcast %74 : vector<1x8x1xf32> to vector<1x8x8xf32>
    %76 = arith.subf %72, %75 : vector<1x8x8xf32>
    %77 = math.exp %76 : vector<1x8x8xf32>
    %cst_28 = arith.constant 0.000000e+00 : f32
    %78 = vector.broadcast %cst_28 : f32 to vector<1x8x8xf32>
    %79 = arith.select %60, %77, %78 : vector<1x8x8xi1>, vector<1x8x8xf32>
    %cst_29 = arith.constant dense<0.000000e+00> : vector<1x8xf32>
    %80 = vector.multi_reduction <add>, %79, %cst_29 [2] : vector<1x8x8xf32> to vector<1x8xf32>
    %81 = vector.shape_cast %80 : vector<1x8xf32> to vector<1x8x1xf32>
    %cst_30 = arith.constant 0.000000e+00 : f32
    %82 = vector.broadcast %cst_30 : f32 to vector<1x8x1xf32>
    %83 = arith.cmpf ogt, %81, %82 : vector<1x8x1xf32>
    %84 = tpu.reciprocal %81 {approx = true} : vector<1x8x1xf32> -> vector<1x8x1xf32>
    %cst_31 = arith.constant 0.000000e+00 : f32
    %85 = vector.broadcast %cst_31 : f32 to vector<1x8x1xf32>
    %86 = arith.select %83, %84, %85 : vector<1x8x1xi1>, vector<1x8x1xf32>
    %87 = vector.broadcast %86 : vector<1x8x1xf32> to vector<1x8x8xf32>
    %88 = arith.mulf %79, %87 : vector<1x8x8xf32>
    %89 = vector.broadcast %54 : vector<1x8x1xf32> to vector<1x8x8xf32>
    %90 = arith.mulf %88, %89 : vector<1x8x8xf32>
    %91 = arith.truncf %90 : vector<1x8x8xf32> to vector<1x8x8xbf16>
    "tpu.trace_start"() <{level = 10 : i32, message = "bqk,bkd->bqd"}> : () -> ()
    %cst_32 = arith.constant dense<0.000000e+00> : vector<1x8x8xf32>
    %92 = tpu.matmul %91, %69, %cst_32 {dimension_numbers = #tpu.dot_dimension_numbers<[2], [1], [1], [2], [0, 0, 0, 1, 1, 2], [0], [0]>} : vector<1x8x8xbf16>, vector<1x8x8xbf16>, vector<1x8x8xf32> -> vector<1x8x8xf32>
    "tpu.trace_stop"() : () -> ()
    %93 = vector.extract_strided_slice %33 {offsets = [0, 8], sizes = [8, 8], strides = [1, 1]} : vector<8x32xf32> to vector<8x8xf32>
    %94 = vector.shape_cast %93 : vector<8x8xf32> to vector<1x8x8xf32>
    %95 = arith.truncf %94 : vector<1x8x8xf32> to vector<1x8x8xbf16>
    %96 = vector.extract_strided_slice %40 {offsets = [0, 8], sizes = [8, 8], strides = [1, 1]} : vector<8x32xf32> to vector<8x8xf32>
    %97 = vector.shape_cast %96 : vector<8x8xf32> to vector<1x8x8xf32>
    %98 = arith.truncf %97 : vector<1x8x8xf32> to vector<1x8x8xbf16>
    %99 = vector.extract_strided_slice %41 {offsets = [0, 8], sizes = [8, 8], strides = [1, 1]} : vector<8x32xf32> to vector<8x8xf32>
    %100 = vector.shape_cast %99 : vector<8x8xf32> to vector<1x8x8xf32>
    %101 = arith.truncf %100 : vector<1x8x8xf32> to vector<1x8x8xbf16>
    "tpu.trace_start"() <{level = 10 : i32, message = "bqd,bkd->bqk"}> : () -> ()
    %cst_33 = arith.constant dense<0.000000e+00> : vector<1x8x8xf32>
    %102 = tpu.matmul %95, %98, %cst_33 {dimension_numbers = #tpu.dot_dimension_numbers<[2], [2], [1], [1], [0, 0, 0, 1, 1, 1], [0], [0]>} : vector<1x8x8xbf16>, vector<1x8x8xbf16>, vector<1x8x8xf32> -> vector<1x8x8xf32>
    %cst_34 = arith.constant -1.000000e+30 : f32
    "tpu.trace_stop"() : () -> ()
    %103 = vector.broadcast %cst_34 : f32 to vector<1x8x8xf32>
    %104 = arith.select %60, %102, %103 : vector<1x8x8xi1>, vector<1x8x8xf32>
    %cst_35 = arith.constant dense<0xFF800000> : vector<1x8xf32>
    %105 = vector.multi_reduction <maximumf>, %104, %cst_35 [2] : vector<1x8x8xf32> to vector<1x8xf32>
    %106 = vector.shape_cast %105 : vector<1x8xf32> to vector<1x8x1xf32>
    %107 = vector.broadcast %106 : vector<1x8x1xf32> to vector<1x8x8xf32>
    %108 = arith.subf %104, %107 : vector<1x8x8xf32>
    %109 = math.exp %108 : vector<1x8x8xf32>
    %cst_36 = arith.constant 0.000000e+00 : f32
    %110 = vector.broadcast %cst_36 : f32 to vector<1x8x8xf32>
    %111 = arith.select %60, %109, %110 : vector<1x8x8xi1>, vector<1x8x8xf32>
    %cst_37 = arith.constant dense<0.000000e+00> : vector<1x8xf32>
    %112 = vector.multi_reduction <add>, %111, %cst_37 [2] : vector<1x8x8xf32> to vector<1x8xf32>
    %113 = vector.shape_cast %112 : vector<1x8xf32> to vector<1x8x1xf32>
    %cst_38 = arith.constant 0.000000e+00 : f32
    %114 = vector.broadcast %cst_38 : f32 to vector<1x8x1xf32>
    %115 = arith.cmpf ogt, %113, %114 : vector<1x8x1xf32>
    %116 = tpu.reciprocal %113 {approx = true} : vector<1x8x1xf32> -> vector<1x8x1xf32>
    %cst_39 = arith.constant 0.000000e+00 : f32
    %117 = vector.broadcast %cst_39 : f32 to vector<1x8x1xf32>
    %118 = arith.select %115, %116, %117 : vector<1x8x1xi1>, vector<1x8x1xf32>
    %119 = vector.broadcast %118 : vector<1x8x1xf32> to vector<1x8x8xf32>
    %120 = arith.mulf %111, %119 : vector<1x8x8xf32>
    %121 = vector.broadcast %54 : vector<1x8x1xf32> to vector<1x8x8xf32>
    %122 = arith.mulf %120, %121 : vector<1x8x8xf32>
    %123 = arith.truncf %122 : vector<1x8x8xf32> to vector<1x8x8xbf16>
    "tpu.trace_start"() <{level = 10 : i32, message = "bqk,bkd->bqd"}> : () -> ()
    %cst_40 = arith.constant dense<0.000000e+00> : vector<1x8x8xf32>
    %124 = tpu.matmul %123, %101, %cst_40 {dimension_numbers = #tpu.dot_dimension_numbers<[2], [1], [1], [2], [0, 0, 0, 1, 1, 2], [0], [0]>} : vector<1x8x8xbf16>, vector<1x8x8xbf16>, vector<1x8x8xf32> -> vector<1x8x8xf32>
    "tpu.trace_stop"() : () -> ()
    %125 = vector.extract_strided_slice %33 {offsets = [0, 16], sizes = [8, 8], strides = [1, 1]} : vector<8x32xf32> to vector<8x8xf32>
    %126 = vector.shape_cast %125 : vector<8x8xf32> to vector<1x8x8xf32>
    %127 = arith.truncf %126 : vector<1x8x8xf32> to vector<1x8x8xbf16>
    %128 = vector.extract_strided_slice %40 {offsets = [0, 16], sizes = [8, 8], strides = [1, 1]} : vector<8x32xf32> to vector<8x8xf32>
    %129 = vector.shape_cast %128 : vector<8x8xf32> to vector<1x8x8xf32>
    %130 = arith.truncf %129 : vector<1x8x8xf32> to vector<1x8x8xbf16>
    %131 = vector.extract_strided_slice %41 {offsets = [0, 16], sizes = [8, 8], strides = [1, 1]} : vector<8x32xf32> to vector<8x8xf32>
    %132 = vector.shape_cast %131 : vector<8x8xf32> to vector<1x8x8xf32>
    %133 = arith.truncf %132 : vector<1x8x8xf32> to vector<1x8x8xbf16>
    "tpu.trace_start"() <{level = 10 : i32, message = "bqd,bkd->bqk"}> : () -> ()
    %cst_41 = arith.constant dense<0.000000e+00> : vector<1x8x8xf32>
    %134 = tpu.matmul %127, %130, %cst_41 {dimension_numbers = #tpu.dot_dimension_numbers<[2], [2], [1], [1], [0, 0, 0, 1, 1, 1], [0], [0]>} : vector<1x8x8xbf16>, vector<1x8x8xbf16>, vector<1x8x8xf32> -> vector<1x8x8xf32>
    %cst_42 = arith.constant -1.000000e+30 : f32
    "tpu.trace_stop"() : () -> ()
    %135 = vector.broadcast %cst_42 : f32 to vector<1x8x8xf32>
    %136 = arith.select %60, %134, %135 : vector<1x8x8xi1>, vector<1x8x8xf32>
    %cst_43 = arith.constant dense<0xFF800000> : vector<1x8xf32>
    %137 = vector.multi_reduction <maximumf>, %136, %cst_43 [2] : vector<1x8x8xf32> to vector<1x8xf32>
    %138 = vector.shape_cast %137 : vector<1x8xf32> to vector<1x8x1xf32>
    %139 = vector.broadcast %138 : vector<1x8x1xf32> to vector<1x8x8xf32>
    %140 = arith.subf %136, %139 : vector<1x8x8xf32>
    %141 = math.exp %140 : vector<1x8x8xf32>
    %cst_44 = arith.constant 0.000000e+00 : f32
    %142 = vector.broadcast %cst_44 : f32 to vector<1x8x8xf32>
    %143 = arith.select %60, %141, %142 : vector<1x8x8xi1>, vector<1x8x8xf32>
    %cst_45 = arith.constant dense<0.000000e+00> : vector<1x8xf32>
    %144 = vector.multi_reduction <add>, %143, %cst_45 [2] : vector<1x8x8xf32> to vector<1x8xf32>
    %145 = vector.shape_cast %144 : vector<1x8xf32> to vector<1x8x1xf32>
    %cst_46 = arith.constant 0.000000e+00 : f32
    %146 = vector.broadcast %cst_46 : f32 to vector<1x8x1xf32>
    %147 = arith.cmpf ogt, %145, %146 : vector<1x8x1xf32>
    %148 = tpu.reciprocal %145 {approx = true} : vector<1x8x1xf32> -> vector<1x8x1xf32>
    %cst_47 = arith.constant 0.000000e+00 : f32
    %149 = vector.broadcast %cst_47 : f32 to vector<1x8x1xf32>
    %150 = arith.select %147, %148, %149 : vector<1x8x1xi1>, vector<1x8x1xf32>
    %151 = vector.broadcast %150 : vector<1x8x1xf32> to vector<1x8x8xf32>
    %152 = arith.mulf %143, %151 : vector<1x8x8xf32>
    %153 = vector.broadcast %54 : vector<1x8x1xf32> to vector<1x8x8xf32>
    %154 = arith.mulf %152, %153 : vector<1x8x8xf32>
    %155 = arith.truncf %154 : vector<1x8x8xf32> to vector<1x8x8xbf16>
    "tpu.trace_start"() <{level = 10 : i32, message = "bqk,bkd->bqd"}> : () -> ()
    %cst_48 = arith.constant dense<0.000000e+00> : vector<1x8x8xf32>
    %156 = tpu.matmul %155, %133, %cst_48 {dimension_numbers = #tpu.dot_dimension_numbers<[2], [1], [1], [2], [0, 0, 0, 1, 1, 2], [0], [0]>} : vector<1x8x8xbf16>, vector<1x8x8xbf16>, vector<1x8x8xf32> -> vector<1x8x8xf32>
    "tpu.trace_stop"() : () -> ()
    %157 = vector.extract_strided_slice %33 {offsets = [0, 24], sizes = [8, 8], strides = [1, 1]} : vector<8x32xf32> to vector<8x8xf32>
    %158 = vector.shape_cast %157 : vector<8x8xf32> to vector<1x8x8xf32>
    %159 = arith.truncf %158 : vector<1x8x8xf32> to vector<1x8x8xbf16>
    %160 = vector.extract_strided_slice %40 {offsets = [0, 24], sizes = [8, 8], strides = [1, 1]} : vector<8x32xf32> to vector<8x8xf32>
    %161 = vector.shape_cast %160 : vector<8x8xf32> to vector<1x8x8xf32>
    %162 = arith.truncf %161 : vector<1x8x8xf32> to vector<1x8x8xbf16>
    %163 = vector.extract_strided_slice %41 {offsets = [0, 24], sizes = [8, 8], strides = [1, 1]} : vector<8x32xf32> to vector<8x8xf32>
    %164 = vector.shape_cast %163 : vector<8x8xf32> to vector<1x8x8xf32>
    %165 = arith.truncf %164 : vector<1x8x8xf32> to vector<1x8x8xbf16>
    "tpu.trace_start"() <{level = 10 : i32, message = "bqd,bkd->bqk"}> : () -> ()
    %cst_49 = arith.constant dense<0.000000e+00> : vector<1x8x8xf32>
    %166 = tpu.matmul %159, %162, %cst_49 {dimension_numbers = #tpu.dot_dimension_numbers<[2], [2], [1], [1], [0, 0, 0, 1, 1, 1], [0], [0]>} : vector<1x8x8xbf16>, vector<1x8x8xbf16>, vector<1x8x8xf32> -> vector<1x8x8xf32>
    %cst_50 = arith.constant -1.000000e+30 : f32
    "tpu.trace_stop"() : () -> ()
    %167 = vector.broadcast %cst_50 : f32 to vector<1x8x8xf32>
    %168 = arith.select %60, %166, %167 : vector<1x8x8xi1>, vector<1x8x8xf32>
    %cst_51 = arith.constant dense<0xFF800000> : vector<1x8xf32>
    %169 = vector.multi_reduction <maximumf>, %168, %cst_51 [2] : vector<1x8x8xf32> to vector<1x8xf32>
    %170 = vector.shape_cast %169 : vector<1x8xf32> to vector<1x8x1xf32>
    %171 = vector.broadcast %170 : vector<1x8x1xf32> to vector<1x8x8xf32>
    %172 = arith.subf %168, %171 : vector<1x8x8xf32>
    %173 = math.exp %172 : vector<1x8x8xf32>
    %cst_52 = arith.constant 0.000000e+00 : f32
    %174 = vector.broadcast %cst_52 : f32 to vector<1x8x8xf32>
    %175 = arith.select %60, %173, %174 : vector<1x8x8xi1>, vector<1x8x8xf32>
    %cst_53 = arith.constant dense<0.000000e+00> : vector<1x8xf32>
    %176 = vector.multi_reduction <add>, %175, %cst_53 [2] : vector<1x8x8xf32> to vector<1x8xf32>
    %177 = vector.shape_cast %176 : vector<1x8xf32> to vector<1x8x1xf32>
    %cst_54 = arith.constant 0.000000e+00 : f32
    %178 = vector.broadcast %cst_54 : f32 to vector<1x8x1xf32>
    %179 = arith.cmpf ogt, %177, %178 : vector<1x8x1xf32>
    %180 = tpu.reciprocal %177 {approx = true} : vector<1x8x1xf32> -> vector<1x8x1xf32>
    %cst_55 = arith.constant 0.000000e+00 : f32
    %181 = vector.broadcast %cst_55 : f32 to vector<1x8x1xf32>
    %182 = arith.select %179, %180, %181 : vector<1x8x1xi1>, vector<1x8x1xf32>
    %183 = vector.broadcast %182 : vector<1x8x1xf32> to vector<1x8x8xf32>
    %184 = arith.mulf %175, %183 : vector<1x8x8xf32>
    %185 = vector.broadcast %54 : vector<1x8x1xf32> to vector<1x8x8xf32>
    %186 = arith.mulf %184, %185 : vector<1x8x8xf32>
    %187 = arith.truncf %186 : vector<1x8x8xf32> to vector<1x8x8xbf16>
    "tpu.trace_start"() <{level = 10 : i32, message = "bqk,bkd->bqd"}> : () -> ()
    %cst_56 = arith.constant dense<0.000000e+00> : vector<1x8x8xf32>
    %188 = tpu.matmul %187, %165, %cst_56 {dimension_numbers = #tpu.dot_dimension_numbers<[2], [1], [1], [2], [0, 0, 0, 1, 1, 2], [0], [0]>} : vector<1x8x8xbf16>, vector<1x8x8xbf16>, vector<1x8x8xf32> -> vector<1x8x8xf32>
    "tpu.trace_stop"() : () -> ()
    %189 = vector.shape_cast %90 : vector<1x8x8xf32> to vector<1x1x8x8xf32>
    %190 = vector.shape_cast %122 : vector<1x8x8xf32> to vector<1x1x8x8xf32>
    %191 = vector.shape_cast %154 : vector<1x8x8xf32> to vector<1x1x8x8xf32>
    %192 = vector.shape_cast %186 : vector<1x8x8xf32> to vector<1x1x8x8xf32>
    %193 = tpu.concatenate %189, %190, %191, %192 in 1 : vector<1x1x8x8xf32>, vector<1x1x8x8xf32>, vector<1x1x8x8xf32>, vector<1x1x8x8xf32> -> vector<1x4x8x8xf32>
    %c0_57 = arith.constant 0 : index
    %c0_58 = arith.constant 0 : index
    %c0_59 = arith.constant 0 : index
    %c0_60 = arith.constant 0 : index
    %194 = vector.load %arg16[%c0_57, %c0_58, %c0_59, %c0_60] : memref<1x4x8x8xf32, #tpu.memory_space<vmem>>, vector<1x4x8x8xf32>
    tpu.vector_store %arg16[%c0_57, %c0_58, %c0_59, %c0_60], %193 {strides = array<i32>} : memref<1x4x8x8xf32, #tpu.memory_space<vmem>>, vector<1x4x8x8xf32>,
    %195 = tpu.concatenate %92, %124, %156, %188 in 2 : vector<1x8x8xf32>, vector<1x8x8xf32>, vector<1x8x8xf32>, vector<1x8x8xf32> -> vector<1x8x32xf32>
    %196 = arith.addf %195, %42 : vector<1x8x32xf32>
    %197 = vector.shape_cast %196 : vector<1x8x32xf32> to vector<8x32xf32>
    %c0_61 = arith.constant 0 : index
    %c0_62 = arith.constant 0 : index
    %198 = vector.load %arg9[%c0_61, %c0_62] : memref<1x32xf32, #tpu.memory_space<vmem>>, vector<1x32xf32>
    %c0_63 = arith.constant 0 : index
    %c0_64 = arith.constant 0 : index
    %199 = vector.load %arg10[%c0_63, %c0_64] : memref<1x32xf32, #tpu.memory_space<vmem>>, vector<1x32xf32>
    %cst_65 = arith.constant dense<0.000000e+00> : vector<8xf32>
    %200 = vector.multi_reduction <add>, %197, %cst_65 [1] : vector<8x32xf32> to vector<8xf32>
    %201 = vector.shape_cast %200 : vector<8xf32> to vector<8x1xf32>
    %cst_66 = arith.constant 3.200000e+01 : f32
    %202 = vector.broadcast %cst_66 : f32 to vector<8x1xf32>
    %203 = arith.divf %201, %202 : vector<8x1xf32>
    %204 = vector.broadcast %203 : vector<8x1xf32> to vector<8x32xf32>
    %205 = arith.subf %197, %204 : vector<8x32xf32>
    %206 = arith.mulf %205, %205 : vector<8x32xf32>
    %cst_67 = arith.constant dense<0.000000e+00> : vector<8xf32>
    %207 = vector.multi_reduction <add>, %206, %cst_67 [1] : vector<8x32xf32> to vector<8xf32>
    %208 = vector.shape_cast %207 : vector<8xf32> to vector<8x1xf32>
    %cst_68 = arith.constant 3.200000e+01 : f32
    %209 = vector.broadcast %cst_68 : f32 to vector<8x1xf32>
    %210 = arith.divf %208, %209 : vector<8x1xf32>
    %211 = vector.broadcast %203 : vector<8x1xf32> to vector<8x32xf32>
    %212 = arith.subf %197, %211 : vector<8x32xf32>
    %cst_69 = arith.constant 9.99999974E-6 : f32
    %213 = vector.broadcast %cst_69 : f32 to vector<8x1xf32>
    %214 = arith.addf %210, %213 : vector<8x1xf32>
    %215 = math.rsqrt %214 : vector<8x1xf32>
    %216 = vector.broadcast %215 : vector<8x1xf32> to vector<8x32xf32>
    %217 = arith.mulf %212, %216 : vector<8x32xf32>
    %218 = vector.broadcast %198 : vector<1x32xf32> to vector<8x32xf32>
    %219 = arith.mulf %217, %218 : vector<8x32xf32>
    %220 = vector.broadcast %199 : vector<1x32xf32> to vector<8x32xf32>
    %221 = arith.addf %219, %220 : vector<8x32xf32>
    %222 = arith.truncf %221 : vector<8x32xf32> to vector<8x32xbf16>
    %c0_70 = arith.constant 0 : index
    %c0_71 = arith.constant 0 : index
    %223 = vector.load %arg11[%c0_70, %c0_71] : memref<32x64xbf16, #tpu.memory_space<vmem>>, vector<32x64xbf16>
    %cst_72 = arith.constant dense<0.000000e+00> : vector<8x64xf32>
    %224 = tpu.matmul %222, %223, %cst_72 {dimension_numbers = #tpu.dot_dimension_numbers<[1], [0], [0], [1], [0, 0, 1, 1], [], []>} : vector<8x32xbf16>, vector<32x64xbf16>, vector<8x64xf32> -> vector<8x64xf32>
    %c0_73 = arith.constant 0 : index
    %c0_74 = arith.constant 0 : index
    %225 = vector.load %arg12[%c0_73, %c0_74] : memref<1x64xf32, #tpu.memory_space<vmem>>, vector<1x64xf32>
    %226 = vector.broadcast %225 : vector<1x64xf32> to vector<8x64xf32>
    %227 = arith.addf %224, %226 : vector<8x64xf32>
    %cst_75 = arith.constant 0.000000e+00 : f32
    %228 = vector.broadcast %cst_75 : f32 to vector<8x64xf32>
    %229 = arith.maximumf %227, %228 : vector<8x64xf32>
    %230 = arith.truncf %229 : vector<8x64xf32> to vector<8x64xbf16>
    %c0_76 = arith.constant 0 : index
    %c0_77 = arith.constant 0 : index
    %231 = vector.load %arg13[%c0_76, %c0_77] : memref<64x32xbf16, #tpu.memory_space<vmem>>, vector<64x32xbf16>
    %cst_78 = arith.constant dense<0.000000e+00> : vector<8x32xf32>
    %232 = tpu.matmul %230, %231, %cst_78 {dimension_numbers = #tpu.dot_dimension_numbers<[1], [0], [0], [1], [0, 0, 1, 1], [], []>} : vector<8x64xbf16>, vector<64x32xbf16>, vector<8x32xf32> -> vector<8x32xf32>
    %c0_79 = arith.constant 0 : index
    %c0_80 = arith.constant 0 : index
    %233 = vector.load %arg14[%c0_79, %c0_80] : memref<1x32xf32, #tpu.memory_space<vmem>>, vector<1x32xf32>
    %234 = vector.broadcast %233 : vector<1x32xf32> to vector<8x32xf32>
    %235 = arith.addf %232, %234 : vector<8x32xf32>
    %236 = arith.addf %235, %221 : vector<8x32xf32>
    %237 = vector.shape_cast %236 : vector<8x32xf32> to vector<1x8x32xf32>
    %c0_81 = arith.constant 0 : index
    %c0_82 = arith.constant 0 : index
    %c0_83 = arith.constant 0 : index
    %238 = vector.load %arg2[%c0_81, %c0_82, %c0_83] : memref<1x8x1xf32, #tpu.memory_space<vmem>>, vector<1x8x1xf32>
    %239 = vector.broadcast %238 : vector<1x8x1xf32> to vector<1x8x32xf32>
    %240 = arith.mulf %237, %239 : vector<1x8x32xf32>
    %c0_84 = arith.constant 0 : index
    %c0_85 = arith.constant 0 : index
    %c0_86 = arith.constant 0 : index
    %241 = vector.load %arg15[%c0_84, %c0_85, %c0_86] : memref<1x8x32xf32, #tpu.memory_space<vmem>>, vector<1x8x32xf32>
    tpu.vector_store %arg15[%c0_84, %c0_85, %c0_86], %240 {strides = array<i32>} : memref<1x8x32xf32, #tpu.memory_space<vmem>>, vector<1x8x32xf32>,
    return
  }
  func.func @transform_0(%arg0: i32) -> (i32, i32, i32) {
    %c0_i32 = arith.constant 0 : i32
    %c0_i32_0 = arith.constant 0 : i32
    %c0_i32_1 = arith.constant 0 : i32
    return %arg0, %c0_i32, %c0_i32_0 : i32, i32, i32
  }
  func.func @transform_1(%arg0: i32) -> (i32, i32, i32) {
    %c0_i32 = arith.constant 0 : i32
    %c0_i32_0 = arith.constant 0 : i32
    %c0_i32_1 = arith.constant 0 : i32
    return %arg0, %c0_i32, %c0_i32_0 : i32, i32, i32
  }
  func.func @transform_2(%arg0: i32) -> (i32, i32) {
    %c0_i32 = arith.constant 0 : i32
    %c0_i32_0 = arith.constant 0 : i32
    %c0_i32_1 = arith.constant 0 : i32
    return %c0_i32, %c0_i32_0 : i32, i32
  }
  func.func @transform_3(%arg0: i32) -> (i32, i32) {
    %c0_i32 = arith.constant 0 : i32
    %c0_i32_0 = arith.constant 0 : i32
    %c0_i32_1 = arith.constant 0 : i32
    return %c0_i32, %c0_i32_0 : i32, i32
  }
  func.func @transform_4(%arg0: i32) -> (i32, i32) {
    %c0_i32 = arith.constant 0 : i32
    %c0_i32_0 = arith.constant 0 : i32
    %c0_i32_1 = arith.constant 0 : i32
    return %c0_i32, %c0_i32_0 : i32, i32
  }
  func.func @transform_5(%arg0: i32) -> (i32, i32) {
    %c0_i32 = arith.constant 0 : i32
    %c0_i32_0 = arith.constant 0 : i32
    %c0_i32_1 = arith.constant 0 : i32
    return %c0_i32, %c0_i32_0 : i32, i32
  }
  func.func @transform_6(%arg0: i32) -> (i32, i32) {
    %c0_i32 = arith.constant 0 : i32
    %c0_i32_0 = arith.constant 0 : i32
    %c0_i32_1 = arith.constant 0 : i32
    return %c0_i32, %c0_i32_0 : i32, i32
  }
  func.func @transform_7(%arg0: i32) -> (i32, i32) {
    %c0_i32 = arith.constant 0 : i32
    %c0_i32_0 = arith.constant 0 : i32
    %c0_i32_1 = arith.constant 0 : i32
    return %c0_i32, %c0_i32_0 : i32, i32
  }
  func.func @transform_8(%arg0: i32) -> (i32, i32) {
    %c0_i32 = arith.constant 0 : i32
    %c0_i32_0 = arith.constant 0 : i32
    %c0_i32_1 = arith.constant 0 : i32
    return %c0_i32, %c0_i32_0 : i32, i32
  }
  func.func @transform_9(%arg0: i32) -> (i32, i32) {
    %c0_i32 = arith.constant 0 : i32
    %c0_i32_0 = arith.constant 0 : i32
    %c0_i32_1 = arith.constant 0 : i32
    return %c0_i32, %c0_i32_0 : i32, i32
  }
  func.func @transform_10(%arg0: i32) -> (i32, i32) {
    %c0_i32 = arith.constant 0 : i32
    %c0_i32_0 = arith.constant 0 : i32
    %c0_i32_1 = arith.constant 0 : i32
    return %c0_i32, %c0_i32_0 : i32, i32
  }
  func.func @transform_11(%arg0: i32) -> (i32, i32) {
    %c0_i32 = arith.constant 0 : i32
    %c0_i32_0 = arith.constant 0 : i32
    %c0_i32_1 = arith.constant 0 : i32
    return %c0_i32, %c0_i32_0 : i32, i32
  }
  func.func @transform_12(%arg0: i32) -> (i32, i32) {
    %c0_i32 = arith.constant 0 : i32
    %c0_i32_0 = arith.constant 0 : i32
    %c0_i32_1 = arith.constant 0 : i32
    return %c0_i32, %c0_i32_0 : i32, i32
  }
  func.func @transform_13(%arg0: i32) -> (i32, i32) {
    %c0_i32 = arith.constant 0 : i32
    %c0_i32_0 = arith.constant 0 : i32
    %c0_i32_1 = arith.constant 0 : i32
    return %c0_i32, %c0_i32_0 : i32, i32
  }
  func.func @transform_14(%arg0: i32) -> (i32, i32, i32) {
    %c0_i32 = arith.constant 0 : i32
    %c0_i32_0 = arith.constant 0 : i32
    %c0_i32_1 = arith.constant 0 : i32
    return %arg0, %c0_i32, %c0_i32_0 : i32, i32, i32
  }
  func.func @transform_15(%arg0: i32) -> (i32, i32, i32, i32) {
    %c0_i32 = arith.constant 0 : i32
    %c0_i32_0 = arith.constant 0 : i32
    %c0_i32_1 = arith.constant 0 : i32
    %c0_i32_2 = arith.constant 0 : i32
    return %arg0, %c0_i32, %c0_i32_0, %c0_i32_1 : i32, i32, i32, i32
  }
}

</mosaic_0001>

<llo_original>
// kernel: tpu_custom_call.1
$region0: #{tpu_custom_call.1}
  #allocation0 [shape = 'u32[]', space=smem, size = 0x4, offset = 0x4, fixed_abs, tag = 'smem constant byte address 0x4 - core index']
  #allocation1 [shape = 'u32[144,128]{1,0:T(1,128)}', space=vmem, size = 0x12000, scoped, tag = 'internal scratch']
  %s0 = inlined_call_operand.vmem [shape: f32[2,8,32], index: 0, kind: input, shape index: {}]
  %s1 = inlined_call_operand.vmem [shape: f32[2,8,1], index: 1, kind: input, shape index: {}]
  %s2 = inlined_call_operand.hbm [shape: f32[1,32], index: 2, kind: input, shape index: {}]
  %s3 = inlined_call_operand.hbm [shape: f32[1,32], index: 3, kind: input, shape index: {}]
  %s4 = inlined_call_operand.vmem [shape: bf16[32,32], index: 4, kind: input, shape index: {}]
  %s5 = inlined_call_operand.hbm [shape: f32[1,32], index: 5, kind: input, shape index: {}]
  %s6 = inlined_call_operand.vmem [shape: bf16[32,64], index: 6, kind: input, shape index: {}]
  %s7 = inlined_call_operand.hbm [shape: f32[1,64], index: 7, kind: input, shape index: {}]
  %s8 = inlined_call_operand.hbm [shape: f32[1,32], index: 8, kind: input, shape index: {}]
  %s9 = inlined_call_operand.vmem [shape: f32[1,32], index: 9, kind: input, shape index: {}]
  %s10 = inlined_call_operand.vmem [shape: bf16[32,64], index: 10, kind: input, shape index: {}]
  %s11 = inlined_call_operand.vmem [shape: f32[1,64], index: 11, kind: input, shape index: {}]
  %s12 = inlined_call_operand.vmem [shape: bf16[64,32], index: 12, kind: input, shape index: {}]
  %s13 = inlined_call_operand.vmem [shape: f32[1,32], index: 13, kind: input, shape index: {}]
  %s14 = inlined_call_operand.hbm [shape: f32[2,8,32], index: 14, kind: output, shape index: {0}]
  %s15 = inlined_call_operand.hbm [shape: f32[2,4,8,8], index: 15, kind: output, shape index: {1}]
  %16 = xla_tuple %s14, %s15
  %s17 = sld [smem:[#allocation0]]
  $region117: #{tpu_custom_call.1} parent=0
    _
  %s19 = ssub.s32 1, %s17
  %s20 = scalar_select 0, %s19, %s17
  $region1: #{tpu_custom_call.1} parent=0
    #allocation2 [shape = 'u8[512]{0}', space=vmem, size = 0x400, scoped, tag = 'input window, operand 2, single buffered']
    #allocation3 [shape = 's32[2]{0}', space=sflag, size = 0x8, scoped, tag = 'scoped memory for tpu_custom_call.1']
    #allocation4 [shape = 's32[2]{0}', space=sflag, size = 0x8, scoped, tag = 'scoped memory for tpu_custom_call.1']
    #allocation5 [shape = 'u8[512]{0}', space=vmem, size = 0x400, scoped, tag = 'input window, operand 3, single buffered']
    #allocation6 [shape = 's32[1]{0}', space=sflag, size = 0x4, scoped, tag = 'scoped memory for tpu_custom_call.1']
    #allocation7 [shape = 'u8[512]{0}', space=vmem, size = 0x400, scoped, tag = 'input window, operand 5, single buffered']
    #allocation8 [shape = 'u8[512]{0}', space=vmem, size = 0x400, scoped, tag = 'input window, operand 7, single buffered']
    #allocation9 [shape = 's32[1]{0}', space=sflag, size = 0x4, scoped, tag = 'scoped memory for tpu_custom_call.1']
    #allocation10 [shape = 'u8[512]{0}', space=vmem, size = 0x400, scoped, tag = 'input window, operand 8, single buffered']
    #allocation11 [shape = 'u8[8192]{0}', space=vmem, size = 0x2000, scoped, tag = 'output window, operand 0']
    #allocation12 [shape = 'u8[32768]{0}', space=vmem, size = 0x8000, scoped, tag = 'output window, operand 1']
    #allocation13 [shape = 's32[2]{0}', space=sflag, size = 0x8, scoped, tag = 'scoped memory for tpu_custom_call.1']
    %21 = vsyncpa [#allocation3], 0
    %22 = vsyncpa [#allocation6], 0
    %23 = vsyncpa [#allocation9], 0
    %24 = vsyncpa [#allocation4], 0
    %s25 = scalar_lea.sflag [#allocation4], 1
    %26 = vsyncpa %s25, 0
    %27 = vsyncpa [#allocation13], 0
    %s28 = scalar_lea.sflag [#allocation13], 1
    %29 = vsyncpa %s28, 0
    loop: start=0, step=1, limit=4
    $region2: #{tpu_custom_call.1} parent=1 // loop_pre_header
      _
    $region3: #{tpu_custom_call.1} parent=1 // loop_header
      %s31 = sphi 0, %s35
      %p32 = scmp.ge.s32.totalorder %s31, 4
      %s41 = sphi 0, %s43
      %s44 = sphi 0, %s41
      %s45 = sphi 0, %s44
      %s61 = sphi 0, %s45
      %s67 = sphi 0, %s69
      %s70 = sphi 0, %s67
      %s71 = sphi 0, %s70
      %s87 = sphi 0, %s71
      %s91 = sphi 0, %s91
      %s93 = sphi 0, %s91
      %s94 = sphi 0, %s93
      %s108 = sphi 0, %s94
      %s112 = sphi 0, %s112
      %s114 = sphi 0, %s112
      %s115 = sphi 0, %s114
      %s129 = sphi 0, %s115
      %s133 = sphi 0, %s133
      %s135 = sphi 0, %s133
      %s136 = sphi 0, %s135
      %s150 = sphi 0, %s136
      %s154 = sphi 0, %s154
      %s156 = sphi 0, %s154
      %s157 = sphi 0, %s156
      %s171 = sphi 0, %s157
      %s175 = sphi 0, %s175
      %s177 = sphi 0, %s175
      %s178 = sphi 0, %s177
      %s192 = sphi 0, %s178
      %s196 = sphi 0, %s196
      %s198 = sphi 0, %s196
      %s199 = sphi 0, %s198
      %s213 = sphi 0, %s199
      %s217 = sphi 0, %s217
      %s219 = sphi 0, %s217
      %s220 = sphi 0, %s219
      %s234 = sphi 0, %s220
      %s238 = sphi 0, %s238
      %s240 = sphi 0, %s238
      %s241 = sphi 0, %s240
      %s255 = sphi 0, %s241
      %s259 = sphi 0, %s259
      %s261 = sphi 0, %s259
      %s262 = sphi 0, %s261
      %s276 = sphi 0, %s262
      %s280 = sphi 0, %s280
      %s282 = sphi 0, %s280
      %s283 = sphi 0, %s282
      %s297 = sphi 0, %s283
      %s301 = sphi 0, %s301
      %s303 = sphi 0, %s301
      %s304 = sphi 0, %s303
      %s318 = sphi 0, %s304
      %s322 = sphi 0, %s322
      %s324 = sphi 0, %s322
      %s325 = sphi 0, %s324
      %s339 = sphi 0, %s325
      %s345 = sphi 0, %s347
      %s348 = sphi 0, %s345
      %s349 = sphi 0, %s348
      %s365 = sphi 0, %s349
      %s371 = sphi 0, %s373
      %s374 = sphi 0, %s371
      %s375 = sphi 0, %s374
      %s391 = sphi 0, %s375
    $region4: #{tpu_custom_call.1} parent=1 // loop_header_branch
      %34 = sbr.rel (%p32) target = $region8
    $region5: #{tpu_custom_call.1} parent=1 // loop_body
      %s36 = ssub.s32 %s31, 1
      %s37 = ssub.s32 %s31, 2
      %s38 = sadd.s32 %s31, 1
      %s39 = ssub.s32 %s31, %s38
      %p40 = scmp.eq.s32.totalorder %s39, 0
      %s42 = sadd.s32 %s41, 1
      %s43 = scalar_select %p40, %s41, %s42
      %p46 = pneg %p40
      %p47 = scmp.eq.s32.totalorder %s31, 1
      %p48 = por %p46, %p47
      %p49 = scmp.ne.s32.totalorder %s41, %s44
      %p50 = scmp.eq.s32.totalorder %s31, 0
      %p51 = por %p49, %p50
      %p52 = scmp.ne.s32.totalorder %s41, %s44
      %p53 = scmp.eq.s32.totalorder %s36, 1
      %p54 = por %p52, %p53
      %p55 = scmp.ne.s32.totalorder %s44, %s45
      %p56 = scmp.eq.s32.totalorder %s36, 0
      %p57 = por %p55, %p56
      %p58 = scmp.ne.s32.totalorder %s44, %s45
      %p59 = scmp.eq.s32.totalorder %s37, 1
      %p60 = por %p58, %p59
      %p62 = scmp.ne.s32.totalorder %s45, %s61
      %p63 = scmp.eq.s32.totalorder %s37, 0
      %p64 = por %p62, %p63
      %s65 = ssub.s32 %s31, %s38
      %p66 = scmp.eq.s32.totalorder %s65, 0
      %s68 = sadd.s32 %s67, 1
      %s69 = scalar_select %p66, %s67, %s68
      %p72 = pneg %p66
      %p73 = scmp.eq.s32.totalorder %s31, 1
      %p74 = por %p72, %p73
      %p75 = scmp.ne.s32.totalorder %s67, %s70
      %p76 = scmp.eq.s32.totalorder %s31, 0
      %p77 = por %p75, %p76
      %p78 = scmp.ne.s32.totalorder %s67, %s70
      %p79 = scmp.eq.s32.totalorder %s36, 1
      %p80 = por %p78, %p79
      %p81 = scmp.ne.s32.totalorder %s70, %s71
      %p82 = scmp.eq.s32.totalorder %s36, 0
      %p83 = por %p81, %p82
      %p84 = scmp.ne.s32.totalorder %s70, %s71
      %p85 = scmp.eq.s32.totalorder %s37, 1
      %p86 = por %p84, %p85
      %p88 = scmp.ne.s32.totalorder %s71, %s87
      %p89 = scmp.eq.s32.totalorder %s37, 0
      %p90 = por %p88, %p89
      %s92 = sadd.s32 %s91, 1
      %p95 = scmp.eq.s32.totalorder %s31, 1
      %p96 = scmp.ne.s32.totalorder %s91, %s93
      %p97 = scmp.eq.s32.totalorder %s31, 0
      %p98 = por %p96, %p97
      %p99 = scmp.ne.s32.totalorder %s91, %s93
      %p100 = scmp.eq.s32.totalorder %s36, 1
      %p101 = por %p99, %p100
      %p102 = scmp.ne.s32.totalorder %s93, %s94
      %p103 = scmp.eq.s32.totalorder %s36, 0
      %p104 = por %p102, %p103
      %p105 = scmp.ne.s32.totalorder %s93, %s94
      %p106 = scmp.eq.s32.totalorder %s37, 1
      %p107 = por %p105, %p106
      %p109 = scmp.ne.s32.totalorder %s94, %s108
      %p110 = scmp.eq.s32.totalorder %s37, 0
      %p111 = por %p109, %p110
      %s113 = sadd.s32 %s112, 1
      %p116 = scmp.eq.s32.totalorder %s31, 1
      %p117 = scmp.ne.s32.totalorder %s112, %s114
      %p118 = scmp.eq.s32.totalorder %s31, 0
      %p119 = por %p117, %p118
      %p120 = scmp.ne.s32.totalorder %s112, %s114
      %p121 = scmp.eq.s32.totalorder %s36, 1
      %p122 = por %p120, %p121
      %p123 = scmp.ne.s32.totalorder %s114, %s115
      %p124 = scmp.eq.s32.totalorder %s36, 0
      %p125 = por %p123, %p124
      %p126 = scmp.ne.s32.totalorder %s114, %s115
      %p127 = scmp.eq.s32.totalorder %s37, 1
      %p128 = por %p126, %p127
      %p130 = scmp.ne.s32.totalorder %s115, %s129
      %p131 = scmp.eq.s32.totalorder %s37, 0
      %p132 = por %p130, %p131
      %s134 = sadd.s32 %s133, 1
      %p137 = scmp.eq.s32.totalorder %s31, 1
      %p138 = scmp.ne.s32.totalorder %s133, %s135
      %p139 = scmp.eq.s32.totalorder %s31, 0
      %p140 = por %p138, %p139
      %p141 = scmp.ne.s32.totalorder %s133, %s135
      %p142 = scmp.eq.s32.totalorder %s36, 1
      %p143 = por %p141, %p142
      %p144 = scmp.ne.s32.totalorder %s135, %s136
      %p145 = scmp.eq.s32.totalorder %s36, 0
      %p146 = por %p144, %p145
      %p147 = scmp.ne.s32.totalorder %s135, %s136
      %p148 = scmp.eq.s32.totalorder %s37, 1
      %p149 = por %p147, %p148
      %p151 = scmp.ne.s32.totalorder %s136, %s150
      %p152 = scmp.eq.s32.totalorder %s37, 0
      %p153 = por %p151, %p152
      %s155 = sadd.s32 %s154, 1
      %p158 = scmp.eq.s32.totalorder %s31, 1
      %p159 = scmp.ne.s32.totalorder %s154, %s156
      %p160 = scmp.eq.s32.totalorder %s31, 0
      %p161 = por %p159, %p160
      %p162 = scmp.ne.s32.totalorder %s154, %s156
      %p163 = scmp.eq.s32.totalorder %s36, 1
      %p164 = por %p162, %p163
      %p165 = scmp.ne.s32.totalorder %s156, %s157
      %p166 = scmp.eq.s32.totalorder %s36, 0
      %p167 = por %p165, %p166
      %p168 = scmp.ne.s32.totalorder %s156, %s157
      %p169 = scmp.eq.s32.totalorder %s37, 1
      %p170 = por %p168, %p169
      %p172 = scmp.ne.s32.totalorder %s157, %s171
      %p173 = scmp.eq.s32.totalorder %s37, 0
      %p174 = por %p172, %p173
      %s176 = sadd.s32 %s175, 1
      %p179 = scmp.eq.s32.totalorder %s31, 1
      %p180 = scmp.ne.s32.totalorder %s175, %s177
      %p181 = scmp.eq.s32.totalorder %s31, 0
      %p182 = por %p180, %p181
      %p183 = scmp.ne.s32.totalorder %s175, %s177
      %p184 = scmp.eq.s32.totalorder %s36, 1
      %p185 = por %p183, %p184
      %p186 = scmp.ne.s32.totalorder %s177, %s178
      %p187 = scmp.eq.s32.totalorder %s36, 0
      %p188 = por %p186, %p187
      %p189 = scmp.ne.s32.totalorder %s177, %s178
      %p190 = scmp.eq.s32.totalorder %s37, 1
      %p191 = por %p189, %p190
      %p193 = scmp.ne.s32.totalorder %s178, %s192
      %p194 = scmp.eq.s32.totalorder %s37, 0
      %p195 = por %p193, %p194
      %s197 = sadd.s32 %s196, 1
      %p200 = scmp.eq.s32.totalorder %s31, 1
      %p201 = scmp.ne.s32.totalorder %s196, %s198
      %p202 = scmp.eq.s32.totalorder %s31, 0
      %p203 = por %p201, %p202
      %p204 = scmp.ne.s32.totalorder %s196, %s198
      %p205 = scmp.eq.s32.totalorder %s36, 1
      %p206 = por %p204, %p205
      %p207 = scmp.ne.s32.totalorder %s198, %s199
      %p208 = scmp.eq.s32.totalorder %s36, 0
      %p209 = por %p207, %p208
      %p210 = scmp.ne.s32.totalorder %s198, %s199
      %p211 = scmp.eq.s32.totalorder %s37, 1
      %p212 = por %p210, %p211
      %p214 = scmp.ne.s32.totalorder %s199, %s213
      %p215 = scmp.eq.s32.totalorder %s37, 0
      %p216 = por %p214, %p215
      %s218 = sadd.s32 %s217, 1
      %p221 = scmp.eq.s32.totalorder %s31, 1
      %p222 = scmp.ne.s32.totalorder %s217, %s219
      %p223 = scmp.eq.s32.totalorder %s31, 0
      %p224 = por %p222, %p223
      %p225 = scmp.ne.s32.totalorder %s217, %s219
      %p226 = scmp.eq.s32.totalorder %s36, 1
      %p227 = por %p225, %p226
      %p228 = scmp.ne.s32.totalorder %s219, %s220
      %p229 = scmp.eq.s32.totalorder %s36, 0
      %p230 = por %p228, %p229
      %p231 = scmp.ne.s32.totalorder %s219, %s220
      %p232 = scmp.eq.s32.totalorder %s37, 1
      %p233 = por %p231, %p232
      %p235 = scmp.ne.s32.totalorder %s220, %s234
      %p236 = scmp.eq.s32.totalorder %s37, 0
      %p237 = por %p235, %p236
      %s239 = sadd.s32 %s238, 1
      %p242 = scmp.eq.s32.totalorder %s31, 1
      %p243 = scmp.ne.s32.totalorder %s238, %s240
      %p244 = scmp.eq.s32.totalorder %s31, 0
      %p245 = por %p243, %p244
      %p246 = scmp.ne.s32.totalorder %s238, %s240
      %p247 = scmp.eq.s32.totalorder %s36, 1
      %p248 = por %p246, %p247
      %p249 = scmp.ne.s32.totalorder %s240, %s241
      %p250 = scmp.eq.s32.totalorder %s36, 0
      %p251 = por %p249, %p250
      %p252 = scmp.ne.s32.totalorder %s240, %s241
      %p253 = scmp.eq.s32.totalorder %s37, 1
      %p254 = por %p252, %p253
      %p256 = scmp.ne.s32.totalorder %s241, %s255
      %p257 = scmp.eq.s32.totalorder %s37, 0
      %p258 = por %p256, %p257
      %s260 = sadd.s32 %s259, 1
      %p263 = scmp.eq.s32.totalorder %s31, 1
      %p264 = scmp.ne.s32.totalorder %s259, %s261
      %p265 = scmp.eq.s32.totalorder %s31, 0
      %p266 = por %p264, %p265
      %p267 = scmp.ne.s32.totalorder %s259, %s261
      %p268 = scmp.eq.s32.totalorder %s36, 1
      %p269 = por %p267, %p268
      %p270 = scmp.ne.s32.totalorder %s261, %s262
      %p271 = scmp.eq.s32.totalorder %s36, 0
      %p272 = por %p270, %p271
      %p273 = scmp.ne.s32.totalorder %s261, %s262
      %p274 = scmp.eq.s32.totalorder %s37, 1
      %p275 = por %p273, %p274
      %p277 = scmp.ne.s32.totalorder %s262, %s276
      %p278 = scmp.eq.s32.totalorder %s37, 0
      %p279 = por %p277, %p278
      %s281 = sadd.s32 %s280, 1
      %p284 = scmp.eq.s32.totalorder %s31, 1
      %p285 = scmp.ne.s32.totalorder %s280, %s282
      %p286 = scmp.eq.s32.totalorder %s31, 0
      %p287 = por %p285, %p286
      %p288 = scmp.ne.s32.totalorder %s280, %s282
      %p289 = scmp.eq.s32.totalorder %s36, 1
      %p290 = por %p288, %p289
      %p291 = scmp.ne.s32.totalorder %s282, %s283
      %p292 = scmp.eq.s32.totalorder %s36, 0
      %p293 = por %p291, %p292
      %p294 = scmp.ne.s32.totalorder %s282, %s283
      %p295 = scmp.eq.s32.totalorder %s37, 1
      %p296 = por %p294, %p295
      %p298 = scmp.ne.s32.totalorder %s283, %s297
      %p299 = scmp.eq.s32.totalorder %s37, 0
      %p300 = por %p298, %p299
      %s302 = sadd.s32 %s301, 1
      %p305 = scmp.eq.s32.totalorder %s31, 1
      %p306 = scmp.ne.s32.totalorder %s301, %s303
      %p307 = scmp.eq.s32.totalorder %s31, 0
      %p308 = por %p306, %p307
      %p309 = scmp.ne.s32.totalorder %s301, %s303
      %p310 = scmp.eq.s32.totalorder %s36, 1
      %p311 = por %p309, %p310
      %p312 = scmp.ne.s32.totalorder %s303, %s304
      %p313 = scmp.eq.s32.totalorder %s36, 0
      %p314 = por %p312, %p313
      %p315 = scmp.ne.s32.totalorder %s303, %s304
      %p316 = scmp.eq.s32.totalorder %s37, 1
      %p317 = por %p315, %p316
      %p319 = scmp.ne.s32.totalorder %s304, %s318
      %p320 = scmp.eq.s32.totalorder %s37, 0
      %p321 = por %p319, %p320
      %s323 = sadd.s32 %s322, 1
      %p326 = scmp.eq.s32.totalorder %s31, 1
      %p327 = scmp.ne.s32.totalorder %s322, %s324
      %p328 = scmp.eq.s32.totalorder %s31, 0
      %p329 = por %p327, %p328
      %p330 = scmp.ne.s32.totalorder %s322, %s324
      %p331 = scmp.eq.s32.totalorder %s36, 1
      %p332 = por %p330, %p331
      %p333 = scmp.ne.s32.totalorder %s324, %s325
      %p334 = scmp.eq.s32.totalorder %s36, 0
      %p335 = por %p333, %p334
      %p336 = scmp.ne.s32.totalorder %s324, %s325
      %p337 = scmp.eq.s32.totalorder %s37, 1
      %p338 = por %p336, %p337
      %p340 = scmp.ne.s32.totalorder %s325, %s339
      %p341 = scmp.eq.s32.totalorder %s37, 0
      %p342 = por %p340, %p341
      %s343 = ssub.s32 %s31, %s38
      %p344 = scmp.eq.s32.totalorder %s343, 0
      %s346 = sadd.s32 %s345, 1
      %s347 = scalar_select %p344, %s345, %s346
      %p350 = pneg %p344
      %p351 = scmp.eq.s32.totalorder %s31, 1
      %p352 = por %p350, %p351
      %p353 = scmp.ne.s32.totalorder %s345, %s348
      %p354 = scmp.eq.s32.totalorder %s31, 0
      %p355 = por %p353, %p354
      %p356 = scmp.ne.s32.totalorder %s345, %s348
      %p357 = scmp.eq.s32.totalorder %s36, 1
      %p358 = por %p356, %p357
      %p359 = scmp.ne.s32.totalorder %s348, %s349
      %p360 = scmp.eq.s32.totalorder %s36, 0
      %p361 = por %p359, %p360
      %p362 = scmp.ne.s32.totalorder %s348, %s349
      %p363 = scmp.eq.s32.totalorder %s37, 1
      %p364 = por %p362, %p363
      %p366 = scmp.ne.s32.totalorder %s349, %s365
      %p367 = scmp.eq.s32.totalorder %s37, 0
      %p368 = por %p366, %p367
      %s369 = ssub.s32 %s31, %s38
      %p370 = scmp.eq.s32.totalorder %s369, 0
      %s372 = sadd.s32 %s371, 1
      %s373 = scalar_select %p370, %s371, %s372
      %p376 = pneg %p370
      %p377 = scmp.eq.s32.totalorder %s31, 1
      %p378 = por %p376, %p377
      %p379 = scmp.ne.s32.totalorder %s371, %s374
      %p380 = scmp.eq.s32.totalorder %s31, 0
      %p381 = por %p379, %p380
      %p382 = scmp.ne.s32.totalorder %s371, %s374
      %p383 = scmp.eq.s32.totalorder %s36, 1
      %p384 = por %p382, %p383
      %p385 = scmp.ne.s32.totalorder %s374, %s375
      %p386 = scmp.eq.s32.totalorder %s36, 0
      %p387 = por %p385, %p386
      %p388 = scmp.ne.s32.totalorder %s374, %s375
      %p389 = scmp.eq.s32.totalorder %s37, 1
      %p390 = por %p388, %p389
      %p392 = scmp.ne.s32.totalorder %s375, %s391
      %p393 = scmp.eq.s32.totalorder %s37, 0
      %p394 = por %p392, %p393
      %p395 = scmp.le.s32.totalorder 1, %s31
      %p396 = scmp.lt.s32.totalorder %s31, 3
      %p397 = pnand %p395, %p396
      %p398 = pneg %p397
      // Predicated region
      $region9: #{tpu_custom_call.1} parent=5 // pred_check
        _
      $region10: #{tpu_custom_call.1} parent=5 // pred_check_branch
        %400 = sbr.rel (%p397) target = $region12
      $region11: #{tpu_custom_call.1} parent=5 // pred_region
        %s401 = ssub.s32 %s31, 1
        // Predicated region
        $region13: #{tpu_custom_call.1} parent=11 // pred_check
          %p402 = pneg %p104
        $region14: #{tpu_custom_call.1} parent=11 // pred_check_branch
          %404 = sbr.rel (%p402) target = $region16
        $region15: #{tpu_custom_call.1} parent=11 // pred_region
          %s406 = ssub.s32 16, 16
          %407 = vsyncadd [#allocation3], %s406
          %s409 = sshll.u32 [#allocation2], 4
          %s410 = int_to_ptr.vmem [resolvable:$true] %s409
          %412 = dma.hbm_to_vmem [thread:$0]  %s2, 16, %s410, [#allocation3]
        $region16: #{tpu_custom_call.1} parent=11 // pred_fallthru
          _
        // Predicated region
        $region17: #{tpu_custom_call.1} parent=11 // pred_check
          %p413 = pneg %p125
        $region18: #{tpu_custom_call.1} parent=11 // pred_check_branch
          %415 = sbr.rel (%p413) target = $region20
        $region19: #{tpu_custom_call.1} parent=11 // pred_region
          %s417 = ssub.s32 16, 16
          %418 = vsyncadd [#allocation6], %s417
          %s420 = sshll.u32 [#allocation5], 4
          %s421 = int_to_ptr.vmem [resolvable:$true] %s420
          %423 = dma.hbm_to_vmem [thread:$0]  %s3, 16, %s421, [#allocation6]
        $region20: #{tpu_custom_call.1} parent=11 // pred_fallthru
          _
        // Predicated region
        $region21: #{tpu_custom_call.1} parent=11 // pred_check
          %p424 = pneg %p146
        $region22: #{tpu_custom_call.1} parent=11 // pred_check_branch
          %426 = sbr.rel (%p424) target = $region24
        $region23: #{tpu_custom_call.1} parent=11 // pred_region
          _
        $region24: #{tpu_custom_call.1} parent=11 // pred_fallthru
          _
        // Predicated region
        $region25: #{tpu_custom_call.1} parent=11 // pred_check
          %p427 = pneg %p167
        $region26: #{tpu_custom_call.1} parent=11 // pred_check_branch
          %429 = sbr.rel (%p427) target = $region28
        $region27: #{tpu_custom_call.1} parent=11 // pred_region
          %s431 = ssub.s32 16, 16
          %432 = vsyncadd [#allocation6], %s431
          %s434 = sshll.u32 [#allocation7], 4
          %s435 = int_to_ptr.vmem [resolvable:$true] %s434
          %437 = dma.hbm_to_vmem [thread:$0]  %s5, 16, %s435, [#allocation6]
        $region28: #{tpu_custom_call.1} parent=11 // pred_fallthru
          _
        // Predicated region
        $region29: #{tpu_custom_call.1} parent=11 // pred_check
          %p438 = pneg %p188
        $region30: #{tpu_custom_call.1} parent=11 // pred_check_branch
          %440 = sbr.rel (%p438) target = $region32
        $region31: #{tpu_custom_call.1} parent=11 // pred_region
          _
        $region32: #{tpu_custom_call.1} parent=11 // pred_fallthru
          _
        // Predicated region
        $region33: #{tpu_custom_call.1} parent=11 // pred_check
          %p441 = pneg %p209
        $region34: #{tpu_custom_call.1} parent=11 // pred_check_branch
          %443 = sbr.rel (%p441) target = $region36
        $region35: #{tpu_custom_call.1} parent=11 // pred_region
          %s445 = ssub.s32 16, 16
          %446 = vsyncadd [#allocation9], %s445
          %s448 = sshll.u32 [#allocation8], 4
          %s449 = int_to_ptr.vmem [resolvable:$true] %s448
          %451 = dma.hbm_to_vmem [thread:$0]  %s7, 16, %s449, [#allocation9]
        $region36: #{tpu_custom_call.1} parent=11 // pred_fallthru
          _
        // Predicated region
        $region37: #{tpu_custom_call.1} parent=11 // pred_check
          %p452 = pneg %p230
        $region38: #{tpu_custom_call.1} parent=11 // pred_check_branch
          %454 = sbr.rel (%p452) target = $region40
        $region39: #{tpu_custom_call.1} parent=11 // pred_region
          %s456 = ssub.s32 16, 16
          %457 = vsyncadd [#allocation9], %s456
          %s459 = sshll.u32 [#allocation10], 4
          %s460 = int_to_ptr.vmem [resolvable:$true] %s459
          %462 = dma.hbm_to_vmem [thread:$0]  %s8, 16, %s460, [#allocation9]
        $region40: #{tpu_custom_call.1} parent=11 // pred_fallthru
          _
        // Predicated region
        $region41: #{tpu_custom_call.1} parent=11 // pred_check
          %p463 = pneg %p251
        $region42: #{tpu_custom_call.1} parent=11 // pred_check_branch
          %465 = sbr.rel (%p463) target = $region44
        $region43: #{tpu_custom_call.1} parent=11 // pred_region
          _
        $region44: #{tpu_custom_call.1} parent=11 // pred_fallthru
          _
        // Predicated region
        $region45: #{tpu_custom_call.1} parent=11 // pred_check
          %p466 = pneg %p272
        $region46: #{tpu_custom_call.1} parent=11 // pred_check_branch
          %468 = sbr.rel (%p466) target = $region48
        $region47: #{tpu_custom_call.1} parent=11 // pred_region
          _
        $region48: #{tpu_custom_call.1} parent=11 // pred_fallthru
          _
        // Predicated region
        $region49: #{tpu_custom_call.1} parent=11 // pred_check
          %p469 = pneg %p293
        $region50: #{tpu_custom_call.1} parent=11 // pred_check_branch
          %471 = sbr.rel (%p469) target = $region52
        $region51: #{tpu_custom_call.1} parent=11 // pred_region
          _
        $region52: #{tpu_custom_call.1} parent=11 // pred_fallthru
          _
        // Predicated region
        $region53: #{tpu_custom_call.1} parent=11 // pred_check
          %p472 = pneg %p314
        $region54: #{tpu_custom_call.1} parent=11 // pred_check_branch
          %474 = sbr.rel (%p472) target = $region56
        $region55: #{tpu_custom_call.1} parent=11 // pred_region
          _
        $region56: #{tpu_custom_call.1} parent=11 // pred_fallthru
          _
        // Predicated region
        $region57: #{tpu_custom_call.1} parent=11 // pred_check
          %p475 = pneg %p335
        $region58: #{tpu_custom_call.1} parent=11 // pred_check_branch
          %477 = sbr.rel (%p475) target = $region60
        $region59: #{tpu_custom_call.1} parent=11 // pred_region
          _
        $region60: #{tpu_custom_call.1} parent=11 // pred_fallthru
          _
      $region12: #{tpu_custom_call.1} parent=5 // pred_fallthru
        _
      %p478 = scmp.lt.s32.totalorder %s31, 2
      // Predicated region
      $region61: #{tpu_custom_call.1} parent=5 // pred_check
        %p479 = pneg %p478
      $region62: #{tpu_custom_call.1} parent=5 // pred_check_branch
        %481 = sbr.rel (%p479) target = $region64
      $region63: #{tpu_custom_call.1} parent=5 // pred_region
        // Predicated region
        $region65: #{tpu_custom_call.1} parent=63 // pred_check
          %p482 = pneg %p51
        $region66: #{tpu_custom_call.1} parent=63 // pred_check_branch
          %484 = sbr.rel (%p482) target = $region68
        $region67: #{tpu_custom_call.1} parent=63 // pred_region
          %p485 = scmp.lt.s32.totalorder %s31, 1
          %s486 = scalar_select %p485, %s31, 1
          %s487 = smul.addr %s486, 8
          %s488 = scalar_lea.vmem %s0, %s487
        $region68: #{tpu_custom_call.1} parent=63 // pred_fallthru
          _
        // Predicated region
        $region69: #{tpu_custom_call.1} parent=63 // pred_check
          %p489 = pneg %p77
        $region70: #{tpu_custom_call.1} parent=63 // pred_check_branch
          %491 = sbr.rel (%p489) target = $region72
        $region71: #{tpu_custom_call.1} parent=63 // pred_region
          %p492 = scmp.lt.s32.totalorder %s31, 1
          %s493 = scalar_select %p492, %s31, 1
          %s494 = smul.addr %s493, 8
          %s495 = scalar_lea.vmem %s1, %s494
        $region72: #{tpu_custom_call.1} parent=63 // pred_fallthru
          _
      $region64: #{tpu_custom_call.1} parent=5 // pred_fallthru
        _
      %p496 = scmp.le.s32.totalorder 1, %s31
      %p497 = scmp.lt.s32.totalorder %s31, 3
      %p498 = pnand %p496, %p497
      %p499 = pneg %p498
      // Predicated region
      $region73: #{tpu_custom_call.1} parent=5 // pred_check
        _
      $region74: #{tpu_custom_call.1} parent=5 // pred_check_branch
        %501 = sbr.rel (%p498) target = $region76
      $region75: #{tpu_custom_call.1} parent=5 // pred_region
        %s502 = ssub.s32 %s31, 1
        // Predicated region
        $region77: #{tpu_custom_call.1} parent=75 // pred_check
          %p503 = pneg %p104
        $region78: #{tpu_custom_call.1} parent=75 // pred_check_branch
          %505 = sbr.rel (%p503) target = $region80
        $region79: #{tpu_custom_call.1} parent=75 // pred_region
          %506 = dma.done [#allocation3], 16
        $region80: #{tpu_custom_call.1} parent=75 // pred_fallthru
          _
        // Predicated region
        $region81: #{tpu_custom_call.1} parent=75 // pred_check
          %p507 = pneg %p125
        $region82: #{tpu_custom_call.1} parent=75 // pred_check_branch
          %509 = sbr.rel (%p507) target = $region84
        $region83: #{tpu_custom_call.1} parent=75 // pred_region
          %510 = dma.done [#allocation6], 16
        $region84: #{tpu_custom_call.1} parent=75 // pred_fallthru
          _
        // Predicated region
        $region85: #{tpu_custom_call.1} parent=75 // pred_check
          %p511 = pneg %p167
        $region86: #{tpu_custom_call.1} parent=75 // pred_check_branch
          %513 = sbr.rel (%p511) target = $region88
        $region87: #{tpu_custom_call.1} parent=75 // pred_region
          %514 = dma.done [#allocation6], 16
        $region88: #{tpu_custom_call.1} parent=75 // pred_fallthru
          _
        // Predicated region
        $region89: #{tpu_custom_call.1} parent=75 // pred_check
          %p515 = pneg %p209
        $region90: #{tpu_custom_call.1} parent=75 // pred_check_branch
          %517 = sbr.rel (%p515) target = $region92
        $region91: #{tpu_custom_call.1} parent=75 // pred_region
          %518 = dma.done [#allocation9], 16
        $region92: #{tpu_custom_call.1} parent=75 // pred_fallthru
          _
        // Predicated region
        $region93: #{tpu_custom_call.1} parent=75 // pred_check
          %p519 = pneg %p230
        $region94: #{tpu_custom_call.1} parent=75 // pred_check_branch
          %521 = sbr.rel (%p519) target = $region96
        $region95: #{tpu_custom_call.1} parent=75 // pred_region
          %522 = dma.done [#allocation9], 16
        $region96: #{tpu_custom_call.1} parent=75 // pred_fallthru
          _
        %p523 = scmp.lt.s32.totalorder %s36, 1
        %s524 = scalar_select %p523, %s36, 1
        %s525 = smul.addr %s524, 8
        %s526 = scalar_lea.vmem %s0, %s525
        %p527 = pneg %p57
        %p528 = pneg %p54
        %p529 = scmp.lt.s32.totalorder %s36, 1
        %s530 = scalar_select %p529, %s36, 1
        %s531 = smul.addr %s530, 8
        %s532 = scalar_lea.vmem %s1, %s531
        %p533 = pneg %p83
        %p534 = pneg %p80
        %p535 = pneg %p104
        %p536 = pneg %p101
        %p537 = pneg %p125
        %p538 = pneg %p122
        %p539 = pneg %p146
        %p540 = pneg %p143
        %p541 = pneg %p167
        %p542 = pneg %p164
        %p543 = pneg %p188
        %p544 = pneg %p185
        %p545 = pneg %p209
        %p546 = pneg %p206
        %p547 = pneg %p230
        %p548 = pneg %p227
        %p549 = pneg %p251
        %p550 = pneg %p248
        %p551 = pneg %p272
        %p552 = pneg %p269
        %p553 = pneg %p293
        %p554 = pneg %p290
        %p555 = pneg %p314
        %p556 = pneg %p311
        %p557 = pneg %p335
        %p558 = pneg %p332
        %p559 = pneg %p361
        %p560 = pneg %p358
        %s561 = sand.u32 %s348, 1
        %s562 = scalar_lea.sflag [#allocation4], %s561
        %s563 = sand.u32 %s348, 1
        %s564 = smul.addr %s563, 8
        %s565 = scalar_lea.vmem [#allocation11], %s564
        %p566 = pneg %p387
        %p567 = pneg %p384
        %s568 = sand.u32 %s374, 1
        %s569 = scalar_lea.sflag [#allocation13], %s568
        %s570 = sand.u32 %s374, 1
        %s571 = smul.addr %s570, 32
        %s572 = scalar_lea.vmem [#allocation12], %s571
        %p573 = scmp.lt.s32.totalorder %s36, 1
        %s574 = scalar_select %p573, %s36, 1
        %s575 = smul.addr %s574, 8
        %s576 = scalar_lea.vmem %s0, %s575
        %p577 = scmp.lt.s32.totalorder %s36, 1
        %s578 = scalar_select %p577, %s36, 1
        %s579 = smul.addr %s578, 8
        %s580 = scalar_lea.vmem %s1, %s579
        %v582 = vld [vmem:[%s576] sm:$0xff]
        %v583 = vld [vmem:[#allocation2] sm:$0x1]
        %v584 = vld [vmem:[#allocation5] sm:$0x1]
        %vm585 = vcmask 261120
        %v586 = vsel %vm585, %v582, 0.0
        %587 = vadd.xlane.f32.xlu0 %v586
        %v588 = vpop.xlane.xlu0 %587
        %v589 = vrcp.pop 32.0
        %v590 = vmul.f32 %v588, %v589
        %v591 = vsub.f32 %v582, %v590
        %v592 = vmul.f32 %v591, %v591
        %v593 = vsel %vm585, %v592, 0.0
        %594 = vadd.xlane.f32.xlu0 %v593
        %v595 = vpop.xlane.xlu0 %594
        %v596 = vmul.f32 %v595, %v589
        %v597 = vadd.f32 %v596, 1e-05
        %v598 = vrsqrt.pop %v597
        %v599 = vmul.f32 %v591, %v598
        %v601 = vlaneseq
        %v602 = vshrl.u32 %v601, 7
        %v603 = vsub.s32 0, %v602
        %v604 = vrot.slane %v583, %v603
        %v606 = vmul.f32 %v599, %v604
        %v608 = vlaneseq
        %v609 = vshrl.u32 %v608, 7
        %v610 = vsub.s32 0, %v609
        %v611 = vrot.slane %v584, %v610
        %v613 = vadd.f32 %v606, %v611
        %v614 = vpack.c.bf16 %v613, %v613
        %v615 = vld [vmem:[%s4] sm:$0xf]
        %v616 = vld [vmem:[%s4 + $0x4] sm:$0xf]
        %v617 = vld [vmem:[%s4 + $0x8] sm:$0xf]
        %v618 = vld [vmem:[%s4 + $0xc] sm:$0xf]
        %v619 = vld [vmem:[#allocation7] sm:$0x1]
        %v621 = vlaneseq
        %v622 = vshrl.u32 %v621, 7
        %v623 = vsub.s32 0, %v622
        %v624 = vrot.slane %v619, %v623
        %v630 = vunpack.c.l.b16 %v615
        %v631 = vunpack.c.l.b16 %v616
        %v632 = vunpack.c.l.b16 %v617
        %v633 = vunpack.c.l.b16 %v618
        %v634 = vpack.c.b16 %v631, %v630
        %v635 = vpack.c.b16 %v633, %v632
        %v639 = vsel %vm585, %v614, 0
        %641 = vmatprep.subr.bf16.mxu0 0
        %642 = vmatpush1.bf16.msra.mxu0 0
        %643 = vmatprep.subr.bf16.mxu0 0
        %644 = vmatpush1.bf16.msra.mxu0 0
        %645 = vmatprep.subr.bf16.mxu0 0
        %646 = vmatpush1.bf16.msra.mxu0 0
        %647 = vmatprep.subr.bf16.mxu0 0
        %648 = vmatpush1.bf16.msra.mxu0 0
        %649 = vmatprep.subr.bf16.mxu0 0
        %650 = vmatpush1.bf16.msra.mxu0 0
        %651 = vmatprep.subr.bf16.mxu0 0
        %652 = vmatpush1.bf16.msra.mxu0 0
        %653 = vmatprep.subr.bf16.mxu0 0
        %654 = vmatpush1.bf16.msra.mxu0 %v635
        %655 = vmatprep.subr.bf16.mxu0 0
        %656 = vmatpush1.bf16.msra.mxu0 %v634
        %657 = vmatprep.subr.bf16.mxu0 0
        %658 = vmatpush2.bf16.msra.mxu0 0
        %659 = vmatprep.subr.bf16.mxu0 0
        %660 = vmatpush2.bf16.msra.mxu0 0
        %661 = vmatprep.subr.bf16.mxu0 0
        %662 = vmatpush2.bf16.msra.mxu0 0
        %663 = vmatprep.subr.bf16.mxu0 0
        %664 = vmatpush2.bf16.msra.mxu0 0
        %665 = vmatprep.subr.bf16.mxu0 0
        %666 = vmatpush2.bf16.msra.mxu0 0
        %667 = vmatprep.subr.bf16.mxu0 0
        %668 = vmatpush2.bf16.msra.mxu0 0
        %669 = vmatprep.subr.bf16.mxu0 0
        %670 = vmatpush2.bf16.msra.mxu0 0
        %671 = vmatprep.subr.bf16.mxu0 0
        %672 = vmatpush2.bf16.msra.mxu0 0
        %673 = vmatprep.mubr.bf16.mxu0 0
        %674 = vmatmul.mubr.bf16.gmra.mxu0 %v639
        %v675 = vpop.f32.mrf.mxu0
        %v676 = vadd.f32 %v624, %v675
        %v677 = vpop.f32.mrf.mxu0
        %v678 = vpop.f32.mrf.mxu0
        %v679 = vpop.f32.mrf.mxu0
        %680 = vdwg.mxu0
        %v681 = vmul.f32 %v676, 0.35355338
        %v682 = vpack.c.bf16 %v582, %v582
        %v683 = vld [vmem:[%s6] sm:$0xf]
        %v684 = vld [vmem:[%s6 + $0x4] sm:$0xf]
        %v685 = vld [vmem:[%s6 + $0x8] sm:$0xf]
        %v686 = vld [vmem:[%s6 + $0xc] sm:$0xf]
        %v687 = vld [vmem:[#allocation8] sm:$0x1]
        %v689 = vlaneseq
        %v690 = vshrl.u32 %v689, 7
        %v691 = vsub.s32 0, %v690
        %v692 = vrot.slane %v687, %v691
        %v698 = vunpack.c.l.b16 %v683
        %v699 = vunpack.c.l.b16 %v684
        %v700 = vunpack.c.l.b16 %v685
        %v701 = vunpack.c.l.b16 %v686
        %v702 = vpack.c.b16 %v699, %v698
        %v703 = vpack.c.b16 %v701, %v700
        %v707 = vsel %vm585, %v682, 0
        %709 = vmatprep.subr.bf16.mxu0 0
        %710 = vmatpush1.bf16.msra.mxu0 0
        %711 = vmatprep.subr.bf16.mxu0 0
        %712 = vmatpush1.bf16.msra.mxu0 0
        %713 = vmatprep.subr.bf16.mxu0 0
        %714 = vmatpush1.bf16.msra.mxu0 0
        %715 = vmatprep.subr.bf16.mxu0 0
        %716 = vmatpush1.bf16.msra.mxu0 0
        %717 = vmatprep.subr.bf16.mxu0 0
        %718 = vmatpush1.bf16.msra.mxu0 0
        %719 = vmatprep.subr.bf16.mxu0 0
        %720 = vmatpush1.bf16.msra.mxu0 0
        %721 = vmatprep.subr.bf16.mxu0 0
        %722 = vmatpush1.bf16.msra.mxu0 %v703
        %723 = vmatprep.subr.bf16.mxu0 0
        %724 = vmatpush1.bf16.msra.mxu0 %v702
        %725 = vmatprep.subr.bf16.mxu0 0
        %726 = vmatpush2.bf16.msra.mxu0 0
        %727 = vmatprep.subr.bf16.mxu0 0
        %728 = vmatpush2.bf16.msra.mxu0 0
        %729 = vmatprep.subr.bf16.mxu0 0
        %730 = vmatpush2.bf16.msra.mxu0 0
        %731 = vmatprep.subr.bf16.mxu0 0
        %732 = vmatpush2.bf16.msra.mxu0 0
        %733 = vmatprep.subr.bf16.mxu0 0
        %734 = vmatpush2.bf16.msra.mxu0 0
        %735 = vmatprep.subr.bf16.mxu0 0
        %736 = vmatpush2.bf16.msra.mxu0 0
        %737 = vmatprep.subr.bf16.mxu0 0
        %738 = vmatpush2.bf16.msra.mxu0 0
        %739 = vmatprep.subr.bf16.mxu0 0
        %740 = vmatpush2.bf16.msra.mxu0 0
        %741 = vmatprep.mubr.bf16.mxu0 0
        %742 = vmatmul.mubr.bf16.gmra.mxu0 %v707
        %v743 = vpop.f32.mrf.mxu0
        %v744 = vadd.f32 %v692, %v743
        %v745 = vpop.f32.mrf.mxu0
        %v746 = vpop.f32.mrf.mxu0
        %v747 = vpop.f32.mrf.mxu0
        %748 = vdwg.mxu0
        %v749 = vand.u32 2147483647, %v582
        %v750 = vsel %vm585, %v749, 0.0
        %751 = vadd.xlane.f32.xlu0 %v750
        %v752 = vpop.xlane.xlu0 %751
        %vm753 = vcmp.gt.f32.partialorder %v752, 0.0
        %v754 = vand.u32 2147483647, %v613
        %v755 = vsel %vm585, %v754, 0.0
        %756 = vadd.xlane.f32.xlu0 %v755
        %v757 = vpop.xlane.xlu0 %756
        %vm758 = vcmp.gt.f32.partialorder %v757, 0.0
        %v759 = vsel %vm758, 1, 0
        %v760 = vcvt.s32.f32 %v759
        %v761 = vlaneseq
        %v762 = vshrl.u32 %v761, 7
        %v763 = vlaneseq
        %v764 = vand.u32 %v763, 127
        %vm765 = vcmp.le.s32.totalorder %v764, %v762
        %v766 = vsel %vm753, 1, 0
        %vm767 = vcmp.eq.s32.totalorder %v766, 1
        %v768 = vsel %vm767, 1, 0
        %v769 = vlaneseq
        %v770 = vshrl.u32 %v769, 7
        %v771 = vsub.s32 %v764, %v770
        %v772 = vrot.slane %v768, %v771
        %vm773 = vcmask 1042434
        %v774 = vsel %vm773, %v772, %v772
        %vm775 = vcmask 1043459
        %v776 = vsel %vm775, %v772, %v774
        %vm777 = vcmask 1044484
        %v778 = vsel %vm777, %v772, %v776
        %vm779 = vcmask 1045509
        %v780 = vsel %vm779, %v772, %v778
        %vm781 = vcmask 1046534
        %v782 = vsel %vm781, %v772, %v780
        %vm783 = vcmask 1047559
        %v784 = vsel %vm783, %v772, %v782
        %vm785 = vcmp.ne.s32.totalorder %v784, 0
        %vm786 = vmand %vm765, %vm785
        %v787 = vpack.c.bf16 %v681, %v681
        %v788 = vpack.c.bf16 %v744, %v744
        %vm789 = vcmask 64512
        %v791 = vsel %vm789, %v787, 0
        %v794 = vsel %vm789, %v788, 0
        %796 = vmatprep.subr.bf16.mxu0 0
        %797 = vmatpush1.bf16.xpose.msra.mxu0 0
        %798 = vmatprep.subr.bf16.mxu0 0
        %799 = vmatpush1.bf16.xpose.msra.mxu0 0
        %800 = vmatprep.subr.bf16.mxu0 0
        %801 = vmatpush1.bf16.xpose.msra.mxu0 0
        %802 = vmatprep.subr.bf16.mxu0 0
        %803 = vmatpush1.bf16.xpose.msra.mxu0 0
        %804 = vmatprep.subr.bf16.mxu0 0
        %805 = vmatpush1.bf16.xpose.msra.mxu0 0
        %806 = vmatprep.subr.bf16.mxu0 0
        %807 = vmatpush1.bf16.xpose.msra.mxu0 0
        %808 = vmatprep.subr.bf16.mxu0 0
        %809 = vmatpush1.bf16.xpose.msra.mxu0 0
        %810 = vmatprep.subr.bf16.mxu0 0
        %811 = vmatpush1.bf16.xpose.msra.mxu0 %v794
        %812 = vmatprep.subr.bf16.mxu0 0
        %813 = vmatpush2.bf16.xpose.msra.mxu0 0
        %814 = vmatprep.subr.bf16.mxu0 0
        %815 = vmatpush2.bf16.xpose.msra.mxu0 0
        %816 = vmatprep.subr.bf16.mxu0 0
        %817 = vmatpush2.bf16.xpose.msra.mxu0 0
        %818 = vmatprep.subr.bf16.mxu0 0
        %819 = vmatpush2.bf16.xpose.msra.mxu0 0
        %820 = vmatprep.subr.bf16.mxu0 0
        %821 = vmatpush2.bf16.xpose.msra.mxu0 0
        %822 = vmatprep.subr.bf16.mxu0 0
        %823 = vmatpush2.bf16.xpose.msra.mxu0 0
        %824 = vmatprep.subr.bf16.mxu0 0
        %825 = vmatpush2.bf16.xpose.msra.mxu0 0
        %826 = vmatprep.subr.bf16.mxu0 0
        %827 = vmatpush2.bf16.xpose.msra.mxu0 0
        %828 = vmatprep.mubr.bf16.mxu0 0
        %829 = vmatmul.mubr.bf16.gmra.mxu0 %v791
        %v830 = vpop.f32.mrf.mxu0
        %v831 = vadd.f32 0.0, %v830
        %v832 = vpop.f32.mrf.mxu0
        %v833 = vpop.f32.mrf.mxu0
        %v834 = vpop.f32.mrf.mxu0
        %835 = vdwg.mxu0
        %v836 = vsel %vm786, %v831, -1e+30
        %v837 = vsel %vm789, %v836, -inf
        %838 = vmax.xlane.f32.xlu0 %v837
        %v839 = vpop.xlane.xlu0 %838
        %v840 = vsub.f32 %v836, %v839
        %v841 = vmul.f32 %v840, 1.442695
        %v842 = vpow.pop %v841
        %v843 = vsel %vm786, %v842, 0.0
        %v844 = vsel %vm789, %v843, 0.0
        %845 = vadd.xlane.f32.xlu0 %v844
        %v846 = vpop.xlane.xlu0 %845
        %vm847 = vcmp.gt.f32.partialorder %v846, 0.0
        %v848 = vrcp.pop %v846
        %v849 = vsel %vm847, %v848, 0.0
        %v850 = vmul.f32 %v843, %v849
        %v851 = vmul.f32 %v850, %v760
        %v852 = vpack.c.bf16 %v851, %v851
        %854 = vrot.lane.b32.xlu0 %v788, 96
        %v855 = vpop.permute.xlu0 %854
        %v857 = vsel %vm789, %v852, 0
        %vm859 = vcmask 1043456
        %v861 = vsel %vm859, %v855, 0
        %863 = vmatprep.subr.bf16.mxu0 0
        %864 = vmatpush1.bf16.msra.mxu0 0
        %865 = vmatprep.subr.bf16.mxu0 0
        %866 = vmatpush1.bf16.msra.mxu0 0
        %867 = vmatprep.subr.bf16.mxu0 0
        %868 = vmatpush1.bf16.msra.mxu0 0
        %869 = vmatprep.subr.bf16.mxu0 0
        %870 = vmatpush1.bf16.msra.mxu0 0
        %871 = vmatprep.subr.bf16.mxu0 0
        %872 = vmatpush1.bf16.msra.mxu0 0
        %873 = vmatprep.subr.bf16.mxu0 0
        %874 = vmatpush1.bf16.msra.mxu0 0
        %875 = vmatprep.subr.bf16.mxu0 0
        %876 = vmatpush1.bf16.msra.mxu0 0
        %877 = vmatprep.subr.bf16.mxu0 0
        %878 = vmatpush1.bf16.msra.mxu0 %v861
        %879 = vmatprep.subr.bf16.mxu0 0
        %880 = vmatpush2.bf16.msra.mxu0 0
        %881 = vmatprep.subr.bf16.mxu0 0
        %882 = vmatpush2.bf16.msra.mxu0 0
        %883 = vmatprep.subr.bf16.mxu0 0
        %884 = vmatpush2.bf16.msra.mxu0 0
        %885 = vmatprep.subr.bf16.mxu0 0
        %886 = vmatpush2.bf16.msra.mxu0 0
        %887 = vmatprep.subr.bf16.mxu0 0
        %888 = vmatpush2.bf16.msra.mxu0 0
        %889 = vmatprep.subr.bf16.mxu0 0
        %890 = vmatpush2.bf16.msra.mxu0 0
        %891 = vmatprep.subr.bf16.mxu0 0
        %892 = vmatpush2.bf16.msra.mxu0 0
        %893 = vmatprep.subr.bf16.mxu0 0
        %894 = vmatpush2.bf16.msra.mxu0 0
        %895 = vmatprep.mubr.bf16.mxu0 0
        %896 = vmatmul.mubr.bf16.gmra.mxu0 %v857
        %v897 = vpop.f32.mrf.mxu0
        %v898 = vadd.f32 0.0, %v897
        %v899 = vpop.f32.mrf.mxu0
        %v900 = vpop.f32.mrf.mxu0
        %v901 = vpop.f32.mrf.mxu0
        %902 = vdwg.mxu0
        %904 = vrot.lane.b32.xlu0 %v787, 120
        %v905 = vpop.permute.xlu0 %904
        %906 = vrot.lane.b32.xlu0 %v788, 120
        %v907 = vpop.permute.xlu0 %906
        %v909 = vsel %vm789, %v905, 0
        %v912 = vsel %vm789, %v907, 0
        %914 = vmatprep.subr.bf16.mxu0 0
        %915 = vmatpush1.bf16.xpose.msra.mxu0 0
        %916 = vmatprep.subr.bf16.mxu0 0
        %917 = vmatpush1.bf16.xpose.msra.mxu0 0
        %918 = vmatprep.subr.bf16.mxu0 0
        %919 = vmatpush1.bf16.xpose.msra.mxu0 0
        %920 = vmatprep.subr.bf16.mxu0 0
        %921 = vmatpush1.bf16.xpose.msra.mxu0 0
        %922 = vmatprep.subr.bf16.mxu0 0
        %923 = vmatpush1.bf16.xpose.msra.mxu0 0
        %924 = vmatprep.subr.bf16.mxu0 0
        %925 = vmatpush1.bf16.xpose.msra.mxu0 0
        %926 = vmatprep.subr.bf16.mxu0 0
        %927 = vmatpush1.bf16.xpose.msra.mxu0 0
        %928 = vmatprep.subr.bf16.mxu0 0
        %929 = vmatpush1.bf16.xpose.msra.mxu0 %v912
        %930 = vmatprep.subr.bf16.mxu0 0
        %931 = vmatpush2.bf16.xpose.msra.mxu0 0
        %932 = vmatprep.subr.bf16.mxu0 0
        %933 = vmatpush2.bf16.xpose.msra.mxu0 0
        %934 = vmatprep.subr.bf16.mxu0 0
        %935 = vmatpush2.bf16.xpose.msra.mxu0 0
        %936 = vmatprep.subr.bf16.mxu0 0
        %937 = vmatpush2.bf16.xpose.msra.mxu0 0
        %938 = vmatprep.subr.bf16.mxu0 0
        %939 = vmatpush2.bf16.xpose.msra.mxu0 0
        %940 = vmatprep.subr.bf16.mxu0 0
        %941 = vmatpush2.bf16.xpose.msra.mxu0 0
        %942 = vmatprep.subr.bf16.mxu0 0
        %943 = vmatpush2.bf16.xpose.msra.mxu0 0
        %944 = vmatprep.subr.bf16.mxu0 0
        %945 = vmatpush2.bf16.xpose.msra.mxu0 0
        %946 = vmatprep.mubr.bf16.mxu0 0
        %947 = vmatmul.mubr.bf16.gmra.mxu0 %v909
        %v948 = vpop.f32.mrf.mxu0
        %v949 = vadd.f32 0.0, %v948
        %v950 = vpop.f32.mrf.mxu0
        %v951 = vpop.f32.mrf.mxu0
        %v952 = vpop.f32.mrf.mxu0
        %953 = vdwg.mxu0
        %v954 = vsel %vm786, %v949, -1e+30
        %v955 = vsel %vm789, %v954, -inf
        %956 = vmax.xlane.f32.xlu0 %v955
        %v957 = vpop.xlane.xlu0 %956
        %v958 = vsub.f32 %v954, %v957
        %v959 = vmul.f32 %v958, 1.442695
        %v960 = vpow.pop %v959
        %v961 = vsel %vm786, %v960, 0.0
        %v962 = vsel %vm789, %v961, 0.0
        %963 = vadd.xlane.f32.xlu0 %v962
        %v964 = vpop.xlane.xlu0 %963
        %vm965 = vcmp.gt.f32.partialorder %v964, 0.0
        %v966 = vrcp.pop %v964
        %v967 = vsel %vm965, %v966, 0.0
        %v968 = vmul.f32 %v961, %v967
        %v969 = vmul.f32 %v968, %v760
        %v970 = vpack.c.bf16 %v969, %v969
        %971 = vrot.lane.b32.xlu0 %v788, 88
        %v972 = vpop.permute.xlu0 %971
        %v974 = vsel %vm789, %v970, 0
        %v977 = vsel %vm859, %v972, 0
        %979 = vmatprep.subr.bf16.mxu0 0
        %980 = vmatpush1.bf16.msra.mxu0 0
        %981 = vmatprep.subr.bf16.mxu0 0
        %982 = vmatpush1.bf16.msra.mxu0 0
        %983 = vmatprep.subr.bf16.mxu0 0
        %984 = vmatpush1.bf16.msra.mxu0 0
        %985 = vmatprep.subr.bf16.mxu0 0
        %986 = vmatpush1.bf16.msra.mxu0 0
        %987 = vmatprep.subr.bf16.mxu0 0
        %988 = vmatpush1.bf16.msra.mxu0 0
        %989 = vmatprep.subr.bf16.mxu0 0
        %990 = vmatpush1.bf16.msra.mxu0 0
        %991 = vmatprep.subr.bf16.mxu0 0
        %992 = vmatpush1.bf16.msra.mxu0 0
        %993 = vmatprep.subr.bf16.mxu0 0
        %994 = vmatpush1.bf16.msra.mxu0 %v977
        %995 = vmatprep.subr.bf16.mxu0 0
        %996 = vmatpush2.bf16.msra.mxu0 0
        %997 = vmatprep.subr.bf16.mxu0 0
        %998 = vmatpush2.bf16.msra.mxu0 0
        %999 = vmatprep.subr.bf16.mxu0 0
        %1000 = vmatpush2.bf16.msra.mxu0 0
        %1001 = vmatprep.subr.bf16.mxu0 0
        %1002 = vmatpush2.bf16.msra.mxu0 0
        %1003 = vmatprep.subr.bf16.mxu0 0
        %1004 = vmatpush2.bf16.msra.mxu0 0
        %1005 = vmatprep.subr.bf16.mxu0 0
        %1006 = vmatpush2.bf16.msra.mxu0 0
        %1007 = vmatprep.subr.bf16.mxu0 0
        %1008 = vmatpush2.bf16.msra.mxu0 0
        %1009 = vmatprep.subr.bf16.mxu0 0
        %1010 = vmatpush2.bf16.msra.mxu0 0
        %1011 = vmatprep.mubr.bf16.mxu0 0
        %1012 = vmatmul.mubr.bf16.gmra.mxu0 %v974
        %v1013 = vpop.f32.mrf.mxu0
        %v1014 = vadd.f32 0.0, %v1013
        %v1015 = vpop.f32.mrf.mxu0
        %v1016 = vpop.f32.mrf.mxu0
        %v1017 = vpop.f32.mrf.mxu0
        %1018 = vdwg.mxu0
        %1019 = vrot.lane.b32.xlu0 %v787, 112
        %v1020 = vpop.permute.xlu0 %1019
        %1021 = vrot.lane.b32.xlu0 %v788, 112
        %v1022 = vpop.permute.xlu0 %1021
        %v1024 = vsel %vm789, %v1020, 0
        %v1027 = vsel %vm789, %v1022, 0
        %1029 = vmatprep.subr.bf16.mxu0 0
        %1030 = vmatpush1.bf16.xpose.msra.mxu0 0
        %1031 = vmatprep.subr.bf16.mxu0 0
        %1032 = vmatpush1.bf16.xpose.msra.mxu0 0
        %1033 = vmatprep.subr.bf16.mxu0 0
        %1034 = vmatpush1.bf16.xpose.msra.mxu0 0
        %1035 = vmatprep.subr.bf16.mxu0 0
        %1036 = vmatpush1.bf16.xpose.msra.mxu0 0
        %1037 = vmatprep.subr.bf16.mxu0 0
        %1038 = vmatpush1.bf16.xpose.msra.mxu0 0
        %1039 = vmatprep.subr.bf16.mxu0 0
        %1040 = vmatpush1.bf16.xpose.msra.mxu0 0
        %1041 = vmatprep.subr.bf16.mxu0 0
        %1042 = vmatpush1.bf16.xpose.msra.mxu0 0
        %1043 = vmatprep.subr.bf16.mxu0 0
        %1044 = vmatpush1.bf16.xpose.msra.mxu0 %v1027
        %1045 = vmatprep.subr.bf16.mxu0 0
        %1046 = vmatpush2.bf16.xpose.msra.mxu0 0
        %1047 = vmatprep.subr.bf16.mxu0 0
        %1048 = vmatpush2.bf16.xpose.msra.mxu0 0
        %1049 = vmatprep.subr.bf16.mxu0 0
        %1050 = vmatpush2.bf16.xpose.msra.mxu0 0
        %1051 = vmatprep.subr.bf16.mxu0 0
        %1052 = vmatpush2.bf16.xpose.msra.mxu0 0
        %1053 = vmatprep.subr.bf16.mxu0 0
        %1054 = vmatpush2.bf16.xpose.msra.mxu0 0
        %1055 = vmatprep.subr.bf16.mxu0 0
        %1056 = vmatpush2.bf16.xpose.msra.mxu0 0
        %1057 = vmatprep.subr.bf16.mxu0 0
        %1058 = vmatpush2.bf16.xpose.msra.mxu0 0
        %1059 = vmatprep.subr.bf16.mxu0 0
        %1060 = vmatpush2.bf16.xpose.msra.mxu0 0
        %1061 = vmatprep.mubr.bf16.mxu0 0
        %1062 = vmatmul.mubr.bf16.gmra.mxu0 %v1024
        %v1063 = vpop.f32.mrf.mxu0
        %v1064 = vadd.f32 0.0, %v1063
        %v1065 = vpop.f32.mrf.mxu0
        %v1066 = vpop.f32.mrf.mxu0
        %v1067 = vpop.f32.mrf.mxu0
        %1068 = vdwg.mxu0
        %v1069 = vsel %vm786, %v1064, -1e+30
        %v1070 = vsel %vm789, %v1069, -inf
        %1071 = vmax.xlane.f32.xlu0 %v1070
        %v1072 = vpop.xlane.xlu0 %1071
        %v1073 = vsub.f32 %v1069, %v1072
        %v1074 = vmul.f32 %v1073, 1.442695
        %v1075 = vpow.pop %v1074
        %v1076 = vsel %vm786, %v1075, 0.0
        %v1077 = vsel %vm789, %v1076, 0.0
        %1078 = vadd.xlane.f32.xlu0 %v1077
        %v1079 = vpop.xlane.xlu0 %1078
        %vm1080 = vcmp.gt.f32.partialorder %v1079, 0.0
        %v1081 = vrcp.pop %v1079
        %v1082 = vsel %vm1080, %v1081, 0.0
        %v1083 = vmul.f32 %v1076, %v1082
        %v1084 = vmul.f32 %v1083, %v760
        %v1085 = vpack.c.bf16 %v1084, %v1084
        %1086 = vrot.lane.b32.xlu0 %v788, 80
        %v1087 = vpop.permute.xlu0 %1086
        %v1089 = vsel %vm789, %v1085, 0
        %v1092 = vsel %vm859, %v1087, 0
        %1094 = vmatprep.subr.bf16.mxu0 0
        %1095 = vmatpush1.bf16.msra.mxu0 0
        %1096 = vmatprep.subr.bf16.mxu0 0
        %1097 = vmatpush1.bf16.msra.mxu0 0
        %1098 = vmatprep.subr.bf16.mxu0 0
        %1099 = vmatpush1.bf16.msra.mxu0 0
        %1100 = vmatprep.subr.bf16.mxu0 0
        %1101 = vmatpush1.bf16.msra.mxu0 0
        %1102 = vmatprep.subr.bf16.mxu0 0
        %1103 = vmatpush1.bf16.msra.mxu0 0
        %1104 = vmatprep.subr.bf16.mxu0 0
        %1105 = vmatpush1.bf16.msra.mxu0 0
        %1106 = vmatprep.subr.bf16.mxu0 0
        %1107 = vmatpush1.bf16.msra.mxu0 0
        %1108 = vmatprep.subr.bf16.mxu0 0
        %1109 = vmatpush1.bf16.msra.mxu0 %v1092
        %1110 = vmatprep.subr.bf16.mxu0 0
        %1111 = vmatpush2.bf16.msra.mxu0 0
        %1112 = vmatprep.subr.bf16.mxu0 0
        %1113 = vmatpush2.bf16.msra.mxu0 0
        %1114 = vmatprep.subr.bf16.mxu0 0
        %1115 = vmatpush2.bf16.msra.mxu0 0
        %1116 = vmatprep.subr.bf16.mxu0 0
        %1117 = vmatpush2.bf16.msra.mxu0 0
        %1118 = vmatprep.subr.bf16.mxu0 0
        %1119 = vmatpush2.bf16.msra.mxu0 0
        %1120 = vmatprep.subr.bf16.mxu0 0
        %1121 = vmatpush2.bf16.msra.mxu0 0
        %1122 = vmatprep.subr.bf16.mxu0 0
        %1123 = vmatpush2.bf16.msra.mxu0 0
        %1124 = vmatprep.subr.bf16.mxu0 0
        %1125 = vmatpush2.bf16.msra.mxu0 0
        %1126 = vmatprep.mubr.bf16.mxu0 0
        %1127 = vmatmul.mubr.bf16.gmra.mxu0 %v1089
        %v1128 = vpop.f32.mrf.mxu0
        %v1129 = vadd.f32 0.0, %v1128
        %v1130 = vpop.f32.mrf.mxu0
        %v1131 = vpop.f32.mrf.mxu0
        %v1132 = vpop.f32.mrf.mxu0
        %1133 = vdwg.mxu0
        %1134 = vrot.lane.b32.xlu0 %v787, 104
        %v1135 = vpop.permute.xlu0 %1134
        %1136 = vrot.lane.b32.xlu0 %v788, 104
        %v1137 = vpop.permute.xlu0 %1136
        %v1139 = vsel %vm789, %v1135, 0
        %v1142 = vsel %vm789, %v1137, 0
        %1144 = vmatprep.subr.bf16.mxu0 0
        %1145 = vmatpush1.bf16.xpose.msra.mxu0 0
        %1146 = vmatprep.subr.bf16.mxu0 0
        %1147 = vmatpush1.bf16.xpose.msra.mxu0 0
        %1148 = vmatprep.subr.bf16.mxu0 0
        %1149 = vmatpush1.bf16.xpose.msra.mxu0 0
        %1150 = vmatprep.subr.bf16.mxu0 0
        %1151 = vmatpush1.bf16.xpose.msra.mxu0 0
        %1152 = vmatprep.subr.bf16.mxu0 0
        %1153 = vmatpush1.bf16.xpose.msra.mxu0 0
        %1154 = vmatprep.subr.bf16.mxu0 0
        %1155 = vmatpush1.bf16.xpose.msra.mxu0 0
        %1156 = vmatprep.subr.bf16.mxu0 0
        %1157 = vmatpush1.bf16.xpose.msra.mxu0 0
        %1158 = vmatprep.subr.bf16.mxu0 0
        %1159 = vmatpush1.bf16.xpose.msra.mxu0 %v1142
        %1160 = vmatprep.subr.bf16.mxu0 0
        %1161 = vmatpush2.bf16.xpose.msra.mxu0 0
        %1162 = vmatprep.subr.bf16.mxu0 0
        %1163 = vmatpush2.bf16.xpose.msra.mxu0 0
        %1164 = vmatprep.subr.bf16.mxu0 0
        %1165 = vmatpush2.bf16.xpose.msra.mxu0 0
        %1166 = vmatprep.subr.bf16.mxu0 0
        %1167 = vmatpush2.bf16.xpose.msra.mxu0 0
        %1168 = vmatprep.subr.bf16.mxu0 0
        %1169 = vmatpush2.bf16.xpose.msra.mxu0 0
        %1170 = vmatprep.subr.bf16.mxu0 0
        %1171 = vmatpush2.bf16.xpose.msra.mxu0 0
        %1172 = vmatprep.subr.bf16.mxu0 0
        %1173 = vmatpush2.bf16.xpose.msra.mxu0 0
        %1174 = vmatprep.subr.bf16.mxu0 0
        %1175 = vmatpush2.bf16.xpose.msra.mxu0 0
        %1176 = vmatprep.mubr.bf16.mxu0 0
        %1177 = vmatmul.mubr.bf16.gmra.mxu0 %v1139
        %v1178 = vpop.f32.mrf.mxu0
        %v1179 = vadd.f32 0.0, %v1178
        %v1180 = vpop.f32.mrf.mxu0
        %v1181 = vpop.f32.mrf.mxu0
        %v1182 = vpop.f32.mrf.mxu0
        %1183 = vdwg.mxu0
        %v1184 = vsel %vm786, %v1179, -1e+30
        %v1185 = vsel %vm789, %v1184, -inf
        %1186 = vmax.xlane.f32.xlu0 %v1185
        %v1187 = vpop.xlane.xlu0 %1186
        %v1188 = vsub.f32 %v1184, %v1187
        %v1189 = vmul.f32 %v1188, 1.442695
        %v1190 = vpow.pop %v1189
        %v1191 = vsel %vm786, %v1190, 0.0
        %v1192 = vsel %vm789, %v1191, 0.0
        %1193 = vadd.xlane.f32.xlu0 %v1192
        %v1194 = vpop.xlane.xlu0 %1193
        %vm1195 = vcmp.gt.f32.partialorder %v1194, 0.0
        %v1196 = vrcp.pop %v1194
        %v1197 = vsel %vm1195, %v1196, 0.0
        %v1198 = vmul.f32 %v1191, %v1197
        %v1199 = vmul.f32 %v1198, %v760
        %v1200 = vpack.c.bf16 %v1199, %v1199
        %1201 = vrot.lane.b32.xlu0 %v788, 72
        %v1202 = vpop.permute.xlu0 %1201
        %v1204 = vsel %vm789, %v1200, 0
        %v1207 = vsel %vm859, %v1202, 0
        %1209 = vmatprep.subr.bf16.mxu0 0
        %1210 = vmatpush1.bf16.msra.mxu0 0
        %1211 = vmatprep.subr.bf16.mxu0 0
        %1212 = vmatpush1.bf16.msra.mxu0 0
        %1213 = vmatprep.subr.bf16.mxu0 0
        %1214 = vmatpush1.bf16.msra.mxu0 0
        %1215 = vmatprep.subr.bf16.mxu0 0
        %1216 = vmatpush1.bf16.msra.mxu0 0
        %1217 = vmatprep.subr.bf16.mxu0 0
        %1218 = vmatpush1.bf16.msra.mxu0 0
        %1219 = vmatprep.subr.bf16.mxu0 0
        %1220 = vmatpush1.bf16.msra.mxu0 0
        %1221 = vmatprep.subr.bf16.mxu0 0
        %1222 = vmatpush1.bf16.msra.mxu0 0
        %1223 = vmatprep.subr.bf16.mxu0 0
        %1224 = vmatpush1.bf16.msra.mxu0 %v1207
        %1225 = vmatprep.subr.bf16.mxu0 0
        %1226 = vmatpush2.bf16.msra.mxu0 0
        %1227 = vmatprep.subr.bf16.mxu0 0
        %1228 = vmatpush2.bf16.msra.mxu0 0
        %1229 = vmatprep.subr.bf16.mxu0 0
        %1230 = vmatpush2.bf16.msra.mxu0 0
        %1231 = vmatprep.subr.bf16.mxu0 0
        %1232 = vmatpush2.bf16.msra.mxu0 0
        %1233 = vmatprep.subr.bf16.mxu0 0
        %1234 = vmatpush2.bf16.msra.mxu0 0
        %1235 = vmatprep.subr.bf16.mxu0 0
        %1236 = vmatpush2.bf16.msra.mxu0 0
        %1237 = vmatprep.subr.bf16.mxu0 0
        %1238 = vmatpush2.bf16.msra.mxu0 0
        %1239 = vmatprep.subr.bf16.mxu0 0
        %1240 = vmatpush2.bf16.msra.mxu0 0
        %1241 = vmatprep.mubr.bf16.mxu0 0
        %1242 = vmatmul.mubr.bf16.gmra.mxu0 %v1204
        %v1243 = vpop.f32.mrf.mxu0
        %v1244 = vadd.f32 0.0, %v1243
        %v1245 = vpop.f32.mrf.mxu0
        %v1246 = vpop.f32.mrf.mxu0
        %v1247 = vpop.f32.mrf.mxu0
        %1248 = vdwg.mxu0
        %1249 = vst.msk [vmem:[%s572] sm:$0xff] %vm789, %v851
        %1250 = vst.msk [vmem:[%s572 + $0x8] sm:$0xff] %vm789, %v969
        %1251 = vst.msk [vmem:[%s572 + $0x10] sm:$0xff] %vm789, %v1084
        %1252 = vst.msk [vmem:[%s572 + $0x18] sm:$0xff] %vm789, %v1199
        %1254 = vrot.lane.b32.xlu0 %v1014, 8
        %v1255 = vpop.permute.xlu0 %1254
        %1258 = vrot.lane.b32.xlu0 %v1129, 16
        %v1259 = vpop.permute.xlu0 %1258
        %1262 = vrot.lane.b32.xlu0 %v1244, 24
        %v1263 = vpop.permute.xlu0 %1262
        %v1265 = vsel %vm789, %v898, %v1255
        %vm1266 = vcmask 130048
        %v1267 = vsel %vm1266, %v1265, %v1259
        %vm1268 = vcmask 195584
        %v1269 = vsel %vm1268, %v1267, %v1263
        %v1270 = vadd.f32 %v1269, %v613
        %v1271 = vld [vmem:[#allocation10] sm:$0x1]
        %v1272 = vld [vmem:[%s9] sm:$0x1]
        %v1273 = vsel %vm585, %v1270, 0.0
        %1274 = vadd.xlane.f32.xlu0 %v1273
        %v1275 = vpop.xlane.xlu0 %1274
        %v1276 = vmul.f32 %v1275, %v589
        %v1277 = vsub.f32 %v1270, %v1276
        %v1278 = vmul.f32 %v1277, %v1277
        %v1279 = vsel %vm585, %v1278, 0.0
        %1280 = vadd.xlane.f32.xlu0 %v1279
        %v1281 = vpop.xlane.xlu0 %1280
        %v1282 = vmul.f32 %v1281, %v589
        %v1283 = vadd.f32 %v1282, 1e-05
        %v1284 = vrsqrt.pop %v1283
        %v1285 = vmul.f32 %v1277, %v1284
        %v1287 = vlaneseq
        %v1288 = vshrl.u32 %v1287, 7
        %v1289 = vsub.s32 0, %v1288
        %v1290 = vrot.slane %v1271, %v1289
        %v1292 = vmul.f32 %v1285, %v1290
        %v1294 = vlaneseq
        %v1295 = vshrl.u32 %v1294, 7
        %v1296 = vsub.s32 0, %v1295
        %v1297 = vrot.slane %v1272, %v1296
        %v1299 = vadd.f32 %v1292, %v1297
        %v1300 = vpack.c.bf16 %v1299, %v1299
        %v1301 = vld [vmem:[%s10] sm:$0xf]
        %v1302 = vld [vmem:[%s10 + $0x4] sm:$0xf]
        %v1303 = vld [vmem:[%s10 + $0x8] sm:$0xf]
        %v1304 = vld [vmem:[%s10 + $0xc] sm:$0xf]
        %v1305 = vld [vmem:[%s11] sm:$0x1]
        %v1307 = vlaneseq
        %v1308 = vshrl.u32 %v1307, 7
        %v1309 = vsub.s32 0, %v1308
        %v1310 = vrot.slane %v1305, %v1309
        %v1316 = vunpack.c.l.b16 %v1301
        %v1317 = vunpack.c.l.b16 %v1302
        %v1318 = vunpack.c.l.b16 %v1303
        %v1319 = vunpack.c.l.b16 %v1304
        %v1320 = vpack.c.b16 %v1317, %v1316
        %v1321 = vpack.c.b16 %v1319, %v1318
        %v1325 = vsel %vm585, %v1300, 0
        %1327 = vmatprep.subr.bf16.mxu0 0
        %1328 = vmatpush1.bf16.msra.mxu0 0
        %1329 = vmatprep.subr.bf16.mxu0 0
        %1330 = vmatpush1.bf16.msra.mxu0 0
        %1331 = vmatprep.subr.bf16.mxu0 0
        %1332 = vmatpush1.bf16.msra.mxu0 0
        %1333 = vmatprep.subr.bf16.mxu0 0
        %1334 = vmatpush1.bf16.msra.mxu0 0
        %1335 = vmatprep.subr.bf16.mxu0 0
        %1336 = vmatpush1.bf16.msra.mxu0 0
        %1337 = vmatprep.subr.bf16.mxu0 0
        %1338 = vmatpush1.bf16.msra.mxu0 0
        %1339 = vmatprep.subr.bf16.mxu0 0
        %1340 = vmatpush1.bf16.msra.mxu0 %v1321
        %1341 = vmatprep.subr.bf16.mxu0 0
        %1342 = vmatpush1.bf16.msra.mxu0 %v1320
        %1343 = vmatprep.subr.bf16.mxu0 0
        %1344 = vmatpush2.bf16.msra.mxu0 0
        %1345 = vmatprep.subr.bf16.mxu0 0
        %1346 = vmatpush2.bf16.msra.mxu0 0
        %1347 = vmatprep.subr.bf16.mxu0 0
        %1348 = vmatpush2.bf16.msra.mxu0 0
        %1349 = vmatprep.subr.bf16.mxu0 0
        %1350 = vmatpush2.bf16.msra.mxu0 0
        %1351 = vmatprep.subr.bf16.mxu0 0
        %1352 = vmatpush2.bf16.msra.mxu0 0
        %1353 = vmatprep.subr.bf16.mxu0 0
        %1354 = vmatpush2.bf16.msra.mxu0 0
        %1355 = vmatprep.subr.bf16.mxu0 0
        %1356 = vmatpush2.bf16.msra.mxu0 0
        %1357 = vmatprep.subr.bf16.mxu0 0
        %1358 = vmatpush2.bf16.msra.mxu0 0
        %1359 = vmatprep.mubr.bf16.mxu0 0
        %1360 = vmatmul.mubr.bf16.gmra.mxu0 %v1325
        %v1361 = vpop.f32.mrf.mxu0
        %v1362 = vadd.f32 %v1310, %v1361
        %v1363 = vpop.f32.mrf.mxu0
        %v1364 = vpop.f32.mrf.mxu0
        %v1365 = vpop.f32.mrf.mxu0
        %1366 = vdwg.mxu0
        %v1367 = vmax.f32 %v1362, 0.0
        %v1368 = vpack.c.bf16 %v1367, %v1367
        %v1369 = vld [vmem:[%s12] sm:$0xf]
        %v1370 = vld [vmem:[%s12 + $0x4] sm:$0xf]
        %v1371 = vld [vmem:[%s12 + $0x8] sm:$0xf]
        %v1372 = vld [vmem:[%s12 + $0xc] sm:$0xf]
        %v1373 = vld [vmem:[%s12 + $0x10] sm:$0xf]
        %v1374 = vld [vmem:[%s12 + $0x14] sm:$0xf]
        %v1375 = vld [vmem:[%s12 + $0x18] sm:$0xf]
        %v1376 = vld [vmem:[%s12 + $0x1c] sm:$0xf]
        %v1377 = vld [vmem:[%s13] sm:$0x1]
        %v1379 = vlaneseq
        %v1380 = vshrl.u32 %v1379, 7
        %v1381 = vsub.s32 0, %v1380
        %v1382 = vrot.slane %v1377, %v1381
        %v1392 = vunpack.c.l.b16 %v1369
        %v1393 = vunpack.c.l.b16 %v1370
        %v1394 = vunpack.c.l.b16 %v1371
        %v1395 = vunpack.c.l.b16 %v1372
        %v1396 = vunpack.c.l.b16 %v1373
        %v1397 = vunpack.c.l.b16 %v1374
        %v1398 = vunpack.c.l.b16 %v1375
        %v1399 = vunpack.c.l.b16 %v1376
        %v1400 = vpack.c.b16 %v1393, %v1392
        %v1401 = vpack.c.b16 %v1395, %v1394
        %v1402 = vpack.c.b16 %v1397, %v1396
        %v1403 = vpack.c.b16 %v1399, %v1398
        %vm1408 = vcmask 523264
        %v1410 = vsel %vm1408, %v1368, 0
        %1412 = vmatprep.subr.bf16.mxu0 0
        %1413 = vmatpush1.bf16.msra.mxu0 0
        %1414 = vmatprep.subr.bf16.mxu0 0
        %1415 = vmatpush1.bf16.msra.mxu0 0
        %1416 = vmatprep.subr.bf16.mxu0 0
        %1417 = vmatpush1.bf16.msra.mxu0 0
        %1418 = vmatprep.subr.bf16.mxu0 0
        %1419 = vmatpush1.bf16.msra.mxu0 0
        %1420 = vmatprep.subr.bf16.mxu0 0
        %1421 = vmatpush1.bf16.msra.mxu0 %v1403
        %1422 = vmatprep.subr.bf16.mxu0 0
        %1423 = vmatpush1.bf16.msra.mxu0 %v1402
        %1424 = vmatprep.subr.bf16.mxu0 0
        %1425 = vmatpush1.bf16.msra.mxu0 %v1401
        %1426 = vmatprep.subr.bf16.mxu0 0
        %1427 = vmatpush1.bf16.msra.mxu0 %v1400
        %1428 = vmatprep.subr.bf16.mxu0 0
        %1429 = vmatpush2.bf16.msra.mxu0 0
        %1430 = vmatprep.subr.bf16.mxu0 0
        %1431 = vmatpush2.bf16.msra.mxu0 0
        %1432 = vmatprep.subr.bf16.mxu0 0
        %1433 = vmatpush2.bf16.msra.mxu0 0
        %1434 = vmatprep.subr.bf16.mxu0 0
        %1435 = vmatpush2.bf16.msra.mxu0 0
        %1436 = vmatprep.subr.bf16.mxu0 0
        %1437 = vmatpush2.bf16.msra.mxu0 0
        %1438 = vmatprep.subr.bf16.mxu0 0
        %1439 = vmatpush2.bf16.msra.mxu0 0
        %1440 = vmatprep.subr.bf16.mxu0 0
        %1441 = vmatpush2.bf16.msra.mxu0 0
        %1442 = vmatprep.subr.bf16.mxu0 0
        %1443 = vmatpush2.bf16.msra.mxu0 0
        %1444 = vmatprep.mubr.bf16.mxu0 0
        %1445 = vmatmul.mubr.bf16.gmra.mxu0 %v1410
        %v1446 = vpop.f32.mrf.mxu0
        %v1447 = vadd.f32 %v1382, %v1446
        %v1448 = vpop.f32.mrf.mxu0
        %v1449 = vpop.f32.mrf.mxu0
        %v1450 = vpop.f32.mrf.mxu0
        %1451 = vdwg.mxu0
        %v1452 = vadd.f32 %v1447, %v1299
        %v1453 = vld [vmem:[%s580] sm:$0xff]
        %1455 = vset.pattern.permute.xlu0 0
        %1456 = vperm.xlu0 %1455, %v1453
        %v1457 = vpop.permute.xlu0 %1456
        %v1459 = vmul.f32 %v1452, %v1457
        %1460 = vst.msk [vmem:[%s565] sm:$0xff] %vm585, %v1459
        %s1461 = sand.u32 %s348, 1
        %s1462 = scalar_lea.sflag [#allocation4], %s1461
        %s1463 = sand.u32 %s348, 1
        %s1464 = smul.addr %s1463, 8
        %s1465 = scalar_lea.vmem [#allocation11], %s1464
        %s1466 = sand.u32 %s374, 1
        %s1467 = scalar_lea.sflag [#allocation13], %s1466
        %s1468 = sand.u32 %s374, 1
        %s1469 = smul.addr %s1468, 32
        %s1470 = scalar_lea.vmem [#allocation12], %s1469
        // Predicated region
        $region97: #{tpu_custom_call.1} parent=75 // pred_check
          %p1471 = pneg %p358
        $region98: #{tpu_custom_call.1} parent=75 // pred_check_branch
          %1473 = sbr.rel (%p1471) target = $region100
        $region99: #{tpu_custom_call.1} parent=75 // pred_region
          %s1475 = ssub.s32 128, 128
          %1476 = vsyncadd %s1462, %s1475
          %s1477 = smul.addr %s36, 128
          %s1478 = scalar_lea.hbm %s14, %s1477
          %s1480 = sshll.u32 %s1465, 4
          %s1481 = int_to_ptr.vmem [resolvable:$true] %s1480
          %1483 = dma.vmem_to_hbm [thread:$0]  %s1481, 128, %s1478, %s1462
        $region100: #{tpu_custom_call.1} parent=75 // pred_fallthru
          _
        // Predicated region
        $region101: #{tpu_custom_call.1} parent=75 // pred_check
          %p1484 = pneg %p384
        $region102: #{tpu_custom_call.1} parent=75 // pred_check_branch
          %1486 = sbr.rel (%p1484) target = $region104
        $region103: #{tpu_custom_call.1} parent=75 // pred_region
          %s1488 = ssub.s32 512, 512
          %1489 = vsyncadd %s1467, %s1488
          %s1490 = smul.addr %s36, 4
          %s1491 = smul.addr %s1490, 128
          %s1492 = scalar_lea.hbm %s15, %s1491
          %s1493 = sshll.u32 %s1470, 4
          %s1494 = int_to_ptr.vmem [resolvable:$true] %s1493
          %1499 = dma.vmem_to_hbm [thread:$0]  %s1494, 512, %s1492, %s1467, 128, 128, 8
        $region104: #{tpu_custom_call.1} parent=75 // pred_fallthru
          _
      $region76: #{tpu_custom_call.1} parent=5 // pred_fallthru
        _
      %p1500 = scmp.le.s32.totalorder 2, %s31
      // Predicated region
      $region105: #{tpu_custom_call.1} parent=5 // pred_check
        %p1501 = pneg %p1500
      $region106: #{tpu_custom_call.1} parent=5 // pred_check_branch
        %1503 = sbr.rel (%p1501) target = $region108
      $region107: #{tpu_custom_call.1} parent=5 // pred_region
        %s1504 = ssub.s32 %s31, 2
        // Predicated region
        $region109: #{tpu_custom_call.1} parent=107 // pred_check
          %p1505 = pneg %p364
        $region110: #{tpu_custom_call.1} parent=107 // pred_check_branch
          %1507 = sbr.rel (%p1505) target = $region112
        $region111: #{tpu_custom_call.1} parent=107 // pred_region
          %s1508 = sand.u32 %s349, 1
          %s1509 = scalar_lea.sflag [#allocation4], %s1508
          %s1510 = sand.u32 %s349, 1
          %s1511 = smul.addr %s1510, 8
          %s1512 = scalar_lea.vmem [#allocation11], %s1511
          %1513 = dma.done %s1509, 128
        $region112: #{tpu_custom_call.1} parent=107 // pred_fallthru
          _
        // Predicated region
        $region113: #{tpu_custom_call.1} parent=107 // pred_check
          %p1514 = pneg %p390
        $region114: #{tpu_custom_call.1} parent=107 // pred_check_branch
          %1516 = sbr.rel (%p1514) target = $region116
        $region115: #{tpu_custom_call.1} parent=107 // pred_region
          %s1517 = sand.u32 %s375, 1
          %s1518 = scalar_lea.sflag [#allocation13], %s1517
          %s1519 = sand.u32 %s375, 1
          %s1520 = smul.addr %s1519, 32
          %s1521 = scalar_lea.vmem [#allocation12], %s1520
          %1522 = dma.done %s1518, 512
        $region116: #{tpu_custom_call.1} parent=107 // pred_fallthru
          _
      $region108: #{tpu_custom_call.1} parent=5 // pred_fallthru
        _
    $region6: #{tpu_custom_call.1} parent=1 // loop_footer
      %s35 = sadd.s32 1, %s31
    $region7: #{tpu_custom_call.1} parent=1 // loop_footer_branch
      %30 = sbr.rel target = $region3
    $region8: #{tpu_custom_call.1} parent=1 // loop_exit
      _
    %1523 = vsyncpa [#allocation3], 1
    %s1524 = scalar_lea.sflag [#allocation3], 1
    %1525 = vsyncpa %s1524, 1
    %1526 = vsyncpa [#allocation6], 1
    %1527 = vsyncpa [#allocation9], 1
    %1528 = vsyncpa [#allocation4], 1
    %s1529 = scalar_lea.sflag [#allocation4], 1
    %1530 = vsyncpa %s1529, 1
    %1531 = vsyncpa [#allocation13], 1
    %s1532 = scalar_lea.sflag [#allocation13], 1
    %1533 = vsyncpa %s1532, 1

</llo_original>
